<compile_context>
chip_gen: v7x
topology: tpu7x:2x2x1
jax: 0.10.0
libtpu: 0.0.40
codegen_flags: <defaults>
</compile_context>

<pallas_src>
import jax
import jax.numpy as jnp
from jax.experimental import pallas as pl
from jax.experimental.pallas import tpu as pltpu

EMBED_DIM = 64      # embedding_dim (module default)
HIDDEN_DIM = 128    # hidden_dim   (module default)
SCALE = 4.0         # InputEmbedding scale
LANE = 128          # TPU lane width
SUB = 8             # f32 sublane tile


def _round_up(x, m):
    return ((x + m - 1) // m) * m


# --------------------------------------------------------------------------
# Fused kernel: LSTM encoder over the whole sequence + primary gather + MLP
# --------------------------------------------------------------------------
def _disc_fused_kernel(sel_ref, obs_ref, w_emb_ref, b_emb_ref,
                       w_ih_ref, w_hh_ref, b_gates_ref,
                       w1_ref, b1_ref, w2_ref, b2_ref, w3_ref, b3_ref,
                       out_ref, xproj_scr):
    T, Np, _ = obs_ref.shape
    steps = T - 1
    H = HIDDEN_DIM
    E = EMBED_DIM

    obs = obs_ref[...]                      # [T, Np, 2]
    obs1 = obs[:-1]                         # [steps, Np, 2]
    obs2 = obs[1:]

    # track_mask: tracks with NaN x-coords at either step keep their state.
    mask = jnp.logical_not(jnp.isnan(obs1[:, :, 0:1]) | jnp.isnan(obs2[:, :, 0:1]))
    mask_b = jnp.broadcast_to(mask, (steps, Np, H))          # hoisted broadcast

    # ----- input embedding for ALL steps (VPU math instead of a K=2 matmul) -----
    vel = obs2 - obs1                                        # [steps, Np, 2]
    vx = SCALE * vel[:, :, 0:1]                              # [steps, Np, 1]
    vy = SCALE * vel[:, :, 1:2]
    w_emb = w_emb_ref[...]                                   # [2, E]
    emb = jnp.maximum(vx * w_emb[0:1, :] + vy * w_emb[1:2, :] + b_emb_ref[...],
                      0.0)                                   # [steps, Np, E]

    # ----- batched input projection: one matmul with M = steps*Np -----
    x_proj = jnp.dot(emb.reshape(steps * Np, E), w_ih_ref[...],
                     preferred_element_type=jnp.float32) + b_gates_ref[...]
    xproj_scr[...] = x_proj                                  # park in VMEM scratch

    # ----- recurrence: only h @ W_hh stays on the serial critical path -----
    # steps is static -> fully unrolled, static slices only.
    h = jnp.zeros((Np, H), jnp.float32)
    c = jnp.zeros((Np, H), jnp.float32)
    for t in range(steps):
        gates = xproj_scr[t * Np:(t + 1) * Np, :] + jnp.dot(
            h, w_hh_ref[...], preferred_element_type=jnp.float32)   # [Np, 4H]
        i_g = jax.nn.sigmoid(gates[:, 0 * H:1 * H])
        f_g = jax.nn.sigmoid(gates[:, 1 * H:2 * H])
        g_g = jnp.tanh(gates[:, 2 * H:3 * H])
        o_g = jax.nn.sigmoid(gates[:, 3 * H:4 * H])
        c_new = f_g * c + i_g * g_g
        h_new = o_g * jnp.tanh(c_new)
        m = mask_b[t]
        h = jnp.where(m, h_new, h)
        c = jnp.where(m, c_new, c)

    # ----- fused primary-row gather (one-hot matmul) + real_classifier MLP -----
    primary = jnp.dot(sel_ref[...], h, preferred_element_type=jnp.float32)  # [Bp, H]
    y = jnp.maximum(jnp.dot(primary, w1_ref[...],
                            preferred_element_type=jnp.float32) + b1_ref[...], 0.0)
    y = jnp.maximum(jnp.dot(y, w2_ref[...],
                            preferred_element_type=jnp.float32) + b2_ref[...], 0.0)
    y = jnp.maximum(jnp.dot(y, w3_ref[...],
                            preferred_element_type=jnp.float32) + b3_ref[...], 0.0)
    out_ref[...] = y                                          # lane-dense [Bp, 128]


# --------------------------------------------------------------------------
# Full forward
# --------------------------------------------------------------------------
@jax.jit
def lstm_discriminator_forward(observed, prediction, goals, batch_split, params):
    del goals  # unused: pool=None and goal_flag=False (module defaults)
    obs_seq = jnp.concatenate([observed, prediction], axis=0)   # [T, N, 2]
    T, N, _ = obs_seq.shape
    Np = _round_up(max(N, SUB), SUB)
    # pad tracks to a sublane multiple (padded rows never get selected)
    obs_pad = jnp.pad(obs_seq.astype(jnp.float32), ((0, 0), (0, Np - N), (0, 0)))

    primary_idx = batch_split[:-1]                              # [B]
    B = primary_idx.shape[0]
    Bp = _round_up(max(B, SUB), SUB)
    idx_pad = jnp.pad(primary_idx, (0, Bp - B))                 # padded rows -> row 0 (dropped)
    sel = jax.nn.one_hot(idx_pad, Np, dtype=jnp.float32)        # [Bp, Np]

    # lane-dense final Linear: scores land in lane 0 of a [Bp, 128] output
    w3p = jnp.pad(params["w3"], ((0, 0), (0, LANE - params["w3"].shape[1])))
    b3p = jnp.pad(params["b3"], ((0, 0), (0, LANE - params["b3"].shape[1])))

    # NOTE: for realistic track counts (N in the hundreds+) add a "parallel" grid
    # axis over track blocks so v7x's second TensorCore is used; at these sizes a
    # single program is fastest (no per-step pipeline overhead).
    out = pl.pallas_call(
        _disc_fused_kernel,
        out_shape=jax.ShapeDtypeStruct((Bp, LANE), jnp.float32),
        in_specs=[pl.BlockSpec(memory_space=pltpu.MemorySpace.VMEM)
                  for _ in range(13)],
        out_specs=pl.BlockSpec(memory_space=pltpu.MemorySpace.VMEM),
        scratch_shapes=[pltpu.VMEM(((T - 1) * Np, 4 * HIDDEN_DIM), jnp.float32)],
    )(sel, obs_pad,
      params["w_emb"], params["b_emb"],
      params["w_ih"], params["w_hh"], params["b_gates"],
      params["w1"], params["b1"], params["w2"], params["b2"], w3p, b3p)

    return out[:B, 0:1]                                         # [B, 1]


# --------------------------------------------------------------------------
# Pure-JAX reference (for correctness check)
# --------------------------------------------------------------------------
def reference_forward(observed, prediction, goals, batch_split, params):
    del goals
    obs_seq = jnp.concatenate([observed, prediction], axis=0)
    T, N, _ = obs_seq.shape
    H = HIDDEN_DIM
    h = jnp.zeros((N, H), jnp.float32)
    c = jnp.zeros((N, H), jnp.float32)
    for t in range(T - 1):
        obs1, obs2 = obs_seq[t], obs_seq[t + 1]
        mask = jnp.logical_not(jnp.isnan(obs1[:, 0:1]) | jnp.isnan(obs2[:, 0:1]))
        vel = obs2 - obs1
        x = jnp.maximum(SCALE * vel @ params["w_emb"] + params["b_emb"], 0.0)
        gates = x @ params["w_ih"] + h @ params["w_hh"] + params["b_gates"]
        i_g = jax.nn.sigmoid(gates[:, 0 * H:1 * H])
        f_g = jax.nn.sigmoid(gates[:, 1 * H:2 * H])
        g_g = jnp.tanh(gates[:, 2 * H:3 * H])
        o_g = jax.nn.sigmoid(gates[:, 3 * H:4 * H])
        c_new = f_g * c + i_g * g_g
        h_new = o_g * jnp.tanh(c_new)
        h = jnp.where(mask, h_new, h)
        c = jnp.where(mask, c_new, c)
    primary = h[batch_split[:-1]]
    y = jnp.maximum(primary @ params["w1"] + params["b1"], 0.0)
    y = jnp.maximum(y @ params["w2"] + params["b2"], 0.0)
    y = jnp.maximum(y @ params["w3"] + params["b3"], 0.0)
    return y


# --------------------------------------------------------------------------
# Deterministic parameter init (synthetic — not a checkpoint load)
# --------------------------------------------------------------------------
def init_params(key):
    ks = jax.random.split(key, 10)
    H, E = HIDDEN_DIM, EMBED_DIM
    s = 0.1
    return {
        # InputEmbedding Linear(2 -> E)
        "w_emb": s * jax.random.normal(ks[0], (2, E), jnp.float32),
        "b_emb": s * jax.random.normal(ks[1], (1, E), jnp.float32),
        # LSTMCell(E -> H): gate order i, f, g, o; combined bias = b_ih + b_hh
        "w_ih": s * jax.random.normal(ks[2], (E, 4 * H), jnp.float32),
        "w_hh": s * jax.random.normal(ks[3], (H, 4 * H), jnp.float32),
        "b_gates": s * jax.random.normal(ks[4], (1, 4 * H), jnp.float32),
        # real_classifier: [H, H/2, H/4, 1], ReLU after every Linear
        "w1": s * jax.random.normal(ks[5], (H, H // 2), jnp.float32),
        "b1": s * jax.random.normal(ks[6], (1, H // 2), jnp.float32),
        "w2": s * jax.random.normal(ks[7], (H // 2, H // 4), jnp.float32),
        "b2": s * jax.random.normal(ks[8], (1, H // 4), jnp.float32),
        "w3": s * jax.random.normal(ks[9], (H // 4, 1), jnp.float32),
        "b3": jnp.zeros((1, 1), jnp.float32),
    }


if __name__ == "__main__":
    key = jax.random.PRNGKey(0)
    k_obs, k_pred, k_goal, k_param = jax.random.split(key, 4)

    obs_length, pred_length, num_tracks = 5, 4, 6
    observed = jax.random.normal(k_obs, (obs_length, num_tracks, 2), jnp.float32)
    prediction = jax.random.normal(k_pred, (pred_length, num_tracks, 2), jnp.float32)
    goals = jax.random.normal(k_goal, (num_tracks, 2), jnp.float32)
    batch_split = jnp.array([0, 3, 6], dtype=jnp.int32)   # 2 scenes

    params = init_params(k_param)

    scores = lstm_discriminator_forward(observed, prediction, goals,
                                        batch_split, params)
    scores = jax.block_until_ready(scores)

    ref = reference_forward(observed, prediction, goals, batch_split, params)
    assert scores.shape == (batch_split.shape[0] - 1, 1)
    assert jnp.allclose(scores, ref, atol=1e-4, rtol=1e-4), (scores, ref)

    print("KERNEL_OK")
</pallas_src>

<mosaic_0001>
module attributes {stable_mosaic.version = 11 : i64} {
  func.func @_disc_fused_kernel(%arg0: memref<8x8xf32, #tpu.memory_space<vmem>>, %arg1: memref<9x8x2xf32, #tpu.memory_space<vmem>>, %arg2: memref<2x64xf32, #tpu.memory_space<vmem>>, %arg3: memref<1x64xf32, #tpu.memory_space<vmem>>, %arg4: memref<64x512xf32, #tpu.memory_space<vmem>>, %arg5: memref<128x512xf32, #tpu.memory_space<vmem>>, %arg6: memref<1x512xf32, #tpu.memory_space<vmem>>, %arg7: memref<128x64xf32, #tpu.memory_space<vmem>>, %arg8: memref<1x64xf32, #tpu.memory_space<vmem>>, %arg9: memref<64x32xf32, #tpu.memory_space<vmem>>, %arg10: memref<1x32xf32, #tpu.memory_space<vmem>>, %arg11: memref<32x128xf32, #tpu.memory_space<vmem>>, %arg12: memref<1x128xf32, #tpu.memory_space<vmem>>, %arg13: memref<8x128xf32, #tpu.memory_space<vmem>>, %arg14: memref<64x512xf32, #tpu.memory_space<vmem>>) attributes {dimension_semantics = [], scalar_prefetch = 0 : i64, scratch_operands = 1 : i64, tpu.core_type = #tpu.core_type<tc>} {
    %c0 = arith.constant 0 : index
    %c0_0 = arith.constant 0 : index
    %c0_1 = arith.constant 0 : index
    %0 = vector.load %arg1[%c0, %c0_0, %c0_1] : memref<9x8x2xf32, #tpu.memory_space<vmem>>, vector<9x8x2xf32>
    %1 = vector.extract_strided_slice %0 {offsets = [0, 0, 0], sizes = [8, 8, 2], strides = [1, 1, 1]} : vector<9x8x2xf32> to vector<8x8x2xf32>
    %2 = vector.extract_strided_slice %0 {offsets = [1, 0, 0], sizes = [8, 8, 2], strides = [1, 1, 1]} : vector<9x8x2xf32> to vector<8x8x2xf32>
    %3 = vector.extract_strided_slice %1 {offsets = [0, 0, 0], sizes = [8, 8, 1], strides = [1, 1, 1]} : vector<8x8x2xf32> to vector<8x8x1xf32>
    %4 = arith.cmpf one, %3, %3 : vector<8x8x1xf32>
    %5 = vector.extract_strided_slice %2 {offsets = [0, 0, 0], sizes = [8, 8, 1], strides = [1, 1, 1]} : vector<8x8x2xf32> to vector<8x8x1xf32>
    %6 = arith.cmpf one, %5, %5 : vector<8x8x1xf32>
    %7 = arith.ori %4, %6 : vector<8x8x1xi1>
    %cst = arith.constant dense<true> : vector<8x8x1xi1>
    %8 = arith.xori %7, %cst : vector<8x8x1xi1>
    %9 = vector.shape_cast %8 : vector<8x8x1xi1> to vector<8x8x1xi1>
    %10 = vector.broadcast %9 : vector<8x8x1xi1> to vector<8x8x128xi1>
    %11 = arith.subf %2, %1 : vector<8x8x2xf32>
    %12 = vector.extract_strided_slice %11 {offsets = [0, 0, 0], sizes = [8, 8, 1], strides = [1, 1, 1]} : vector<8x8x2xf32> to vector<8x8x1xf32>
    %cst_2 = arith.constant 4.000000e+00 : f32
    %13 = vector.broadcast %cst_2 : f32 to vector<8x8x1xf32>
    %14 = arith.mulf %13, %12 : vector<8x8x1xf32>
    %15 = vector.extract_strided_slice %11 {offsets = [0, 0, 1], sizes = [8, 8, 1], strides = [1, 1, 1]} : vector<8x8x2xf32> to vector<8x8x1xf32>
    %cst_3 = arith.constant 4.000000e+00 : f32
    %16 = vector.broadcast %cst_3 : f32 to vector<8x8x1xf32>
    %17 = arith.mulf %16, %15 : vector<8x8x1xf32>
    %c0_4 = arith.constant 0 : index
    %c0_5 = arith.constant 0 : index
    %18 = vector.load %arg2[%c0_4, %c0_5] : memref<2x64xf32, #tpu.memory_space<vmem>>, vector<2x64xf32>
    %19 = vector.extract_strided_slice %18 {offsets = [0, 0], sizes = [1, 64], strides = [1, 1]} : vector<2x64xf32> to vector<1x64xf32>
    %20 = vector.shape_cast %19 : vector<1x64xf32> to vector<1x1x64xf32>
    %21 = vector.broadcast %14 : vector<8x8x1xf32> to vector<8x8x64xf32>
    %22 = vector.broadcast %20 : vector<1x1x64xf32> to vector<8x8x64xf32>
    %23 = arith.mulf %21, %22 : vector<8x8x64xf32>
    %24 = vector.extract_strided_slice %18 {offsets = [1, 0], sizes = [1, 64], strides = [1, 1]} : vector<2x64xf32> to vector<1x64xf32>
    %25 = vector.shape_cast %24 : vector<1x64xf32> to vector<1x1x64xf32>
    %26 = vector.broadcast %17 : vector<8x8x1xf32> to vector<8x8x64xf32>
    %27 = vector.broadcast %25 : vector<1x1x64xf32> to vector<8x8x64xf32>
    %28 = arith.mulf %26, %27 : vector<8x8x64xf32>
    %29 = arith.addf %23, %28 : vector<8x8x64xf32>
    %c0_6 = arith.constant 0 : index
    %c0_7 = arith.constant 0 : index
    %30 = vector.load %arg3[%c0_6, %c0_7] : memref<1x64xf32, #tpu.memory_space<vmem>>, vector<1x64xf32>
    %31 = vector.shape_cast %30 : vector<1x64xf32> to vector<1x1x64xf32>
    %32 = vector.broadcast %31 : vector<1x1x64xf32> to vector<8x8x64xf32>
    %33 = arith.addf %29, %32 : vector<8x8x64xf32>
    %cst_8 = arith.constant 0.000000e+00 : f32
    %34 = vector.broadcast %cst_8 : f32 to vector<8x8x64xf32>
    %35 = arith.maximumf %33, %34 : vector<8x8x64xf32>
    %36 = vector.shape_cast %35 : vector<8x8x64xf32> to vector<64x64xf32>
    %c0_9 = arith.constant 0 : index
    %c0_10 = arith.constant 0 : index
    %37 = vector.load %arg4[%c0_9, %c0_10] : memref<64x512xf32, #tpu.memory_space<vmem>>, vector<64x512xf32>
    %cst_11 = arith.constant dense<0.000000e+00> : vector<64x512xf32>
    %38 = tpu.matmul %36, %37, %cst_11 {dimension_numbers = #tpu.dot_dimension_numbers<[1], [0], [0], [1], [0, 0, 1, 1], [], []>} : vector<64x64xf32>, vector<64x512xf32>, vector<64x512xf32> -> vector<64x512xf32>
    %c0_12 = arith.constant 0 : index
    %c0_13 = arith.constant 0 : index
    %39 = vector.load %arg6[%c0_12, %c0_13] : memref<1x512xf32, #tpu.memory_space<vmem>>, vector<1x512xf32>
    %40 = vector.broadcast %39 : vector<1x512xf32> to vector<64x512xf32>
    %41 = arith.addf %38, %40 : vector<64x512xf32>
    %c0_14 = arith.constant 0 : index
    %c0_15 = arith.constant 0 : index
    %42 = vector.load %arg14[%c0_14, %c0_15] : memref<64x512xf32, #tpu.memory_space<vmem>>, vector<64x512xf32>
    tpu.vector_store %arg14[%c0_14, %c0_15], %41 {strides = array<i32>} : memref<64x512xf32, #tpu.memory_space<vmem>>, vector<64x512xf32>,
    %cst_16 = arith.constant 0.000000e+00 : f32
    %43 = vector.broadcast %cst_16 : f32 to vector<8x128xf32>
    %cst_17 = arith.constant 0.000000e+00 : f32
    %44 = vector.broadcast %cst_17 : f32 to vector<8x128xf32>
    %c0_18 = arith.constant 0 : index
    %c0_19 = arith.constant 0 : index
    %45 = vector.load %arg14[%c0_18, %c0_19] : memref<64x512xf32, #tpu.memory_space<vmem>>, vector<8x512xf32>
    %c0_20 = arith.constant 0 : index
    %c0_21 = arith.constant 0 : index
    %46 = vector.load %arg5[%c0_20, %c0_21] : memref<128x512xf32, #tpu.memory_space<vmem>>, vector<128x512xf32>
    %cst_22 = arith.constant dense<0.000000e+00> : vector<8x512xf32>
    %47 = tpu.matmul %43, %46, %cst_22 {dimension_numbers = #tpu.dot_dimension_numbers<[1], [0], [0], [1], [0, 0, 1, 1], [], []>} : vector<8x128xf32>, vector<128x512xf32>, vector<8x512xf32> -> vector<8x512xf32>
    %48 = arith.addf %45, %47 : vector<8x512xf32>
    %49 = vector.extract_strided_slice %48 {offsets = [0, 0], sizes = [8, 128], strides = [1, 1]} : vector<8x512xf32> to vector<8x128xf32>
    %50 = arith.negf %49 : vector<8x128xf32>
    %51 = math.exp %50 : vector<8x128xf32>
    %cst_23 = arith.constant 1.000000e+00 : f32
    %52 = vector.broadcast %cst_23 : f32 to vector<8x128xf32>
    %53 = arith.addf %52, %51 : vector<8x128xf32>
    %54 = arith.divf %52, %53 : vector<8x128xf32>
    %55 = vector.extract_strided_slice %48 {offsets = [0, 128], sizes = [8, 128], strides = [1, 1]} : vector<8x512xf32> to vector<8x128xf32>
    %56 = arith.negf %55 : vector<8x128xf32>
    %57 = math.exp %56 : vector<8x128xf32>
    %cst_24 = arith.constant 1.000000e+00 : f32
    %58 = vector.broadcast %cst_24 : f32 to vector<8x128xf32>
    %59 = arith.addf %58, %57 : vector<8x128xf32>
    %60 = arith.divf %58, %59 : vector<8x128xf32>
    %61 = vector.extract_strided_slice %48 {offsets = [0, 256], sizes = [8, 128], strides = [1, 1]} : vector<8x512xf32> to vector<8x128xf32>
    %62 = math.tanh %61 : vector<8x128xf32>
    %63 = vector.extract_strided_slice %48 {offsets = [0, 384], sizes = [8, 128], strides = [1, 1]} : vector<8x512xf32> to vector<8x128xf32>
    %64 = arith.negf %63 : vector<8x128xf32>
    %65 = math.exp %64 : vector<8x128xf32>
    %cst_25 = arith.constant 1.000000e+00 : f32
    %66 = vector.broadcast %cst_25 : f32 to vector<8x128xf32>
    %67 = arith.addf %66, %65 : vector<8x128xf32>
    %68 = arith.divf %66, %67 : vector<8x128xf32>
    %69 = arith.mulf %60, %44 : vector<8x128xf32>
    %70 = arith.mulf %54, %62 : vector<8x128xf32>
    %71 = arith.addf %69, %70 : vector<8x128xf32>
    %72 = math.tanh %71 : vector<8x128xf32>
    %73 = arith.mulf %68, %72 : vector<8x128xf32>
    %74 = vector.extract_strided_slice %10 {offsets = [0, 0, 0], sizes = [1, 8, 128], strides = [1, 1, 1]} : vector<8x8x128xi1> to vector<1x8x128xi1>
    %75 = vector.shape_cast %74 : vector<1x8x128xi1> to vector<8x128xi1>
    %76 = arith.select %75, %73, %43 : vector<8x128xi1>, vector<8x128xf32>
    %77 = arith.select %75, %71, %44 : vector<8x128xi1>, vector<8x128xf32>
    %c8 = arith.constant 8 : index
    %c0_26 = arith.constant 0 : index
    %78 = vector.load %arg14[%c8, %c0_26] : memref<64x512xf32, #tpu.memory_space<vmem>>, vector<8x512xf32>
    %c0_27 = arith.constant 0 : index
    %c0_28 = arith.constant 0 : index
    %79 = vector.load %arg5[%c0_27, %c0_28] : memref<128x512xf32, #tpu.memory_space<vmem>>, vector<128x512xf32>
    %cst_29 = arith.constant dense<0.000000e+00> : vector<8x512xf32>
    %80 = tpu.matmul %76, %79, %cst_29 {dimension_numbers = #tpu.dot_dimension_numbers<[1], [0], [0], [1], [0, 0, 1, 1], [], []>} : vector<8x128xf32>, vector<128x512xf32>, vector<8x512xf32> -> vector<8x512xf32>
    %81 = arith.addf %78, %80 : vector<8x512xf32>
    %82 = vector.extract_strided_slice %81 {offsets = [0, 0], sizes = [8, 128], strides = [1, 1]} : vector<8x512xf32> to vector<8x128xf32>
    %83 = arith.negf %82 : vector<8x128xf32>
    %84 = math.exp %83 : vector<8x128xf32>
    %cst_30 = arith.constant 1.000000e+00 : f32
    %85 = vector.broadcast %cst_30 : f32 to vector<8x128xf32>
    %86 = arith.addf %85, %84 : vector<8x128xf32>
    %87 = arith.divf %85, %86 : vector<8x128xf32>
    %88 = vector.extract_strided_slice %81 {offsets = [0, 128], sizes = [8, 128], strides = [1, 1]} : vector<8x512xf32> to vector<8x128xf32>
    %89 = arith.negf %88 : vector<8x128xf32>
    %90 = math.exp %89 : vector<8x128xf32>
    %cst_31 = arith.constant 1.000000e+00 : f32
    %91 = vector.broadcast %cst_31 : f32 to vector<8x128xf32>
    %92 = arith.addf %91, %90 : vector<8x128xf32>
    %93 = arith.divf %91, %92 : vector<8x128xf32>
    %94 = vector.extract_strided_slice %81 {offsets = [0, 256], sizes = [8, 128], strides = [1, 1]} : vector<8x512xf32> to vector<8x128xf32>
    %95 = math.tanh %94 : vector<8x128xf32>
    %96 = vector.extract_strided_slice %81 {offsets = [0, 384], sizes = [8, 128], strides = [1, 1]} : vector<8x512xf32> to vector<8x128xf32>
    %97 = arith.negf %96 : vector<8x128xf32>
    %98 = math.exp %97 : vector<8x128xf32>
    %cst_32 = arith.constant 1.000000e+00 : f32
    %99 = vector.broadcast %cst_32 : f32 to vector<8x128xf32>
    %100 = arith.addf %99, %98 : vector<8x128xf32>
    %101 = arith.divf %99, %100 : vector<8x128xf32>
    %102 = arith.mulf %93, %77 : vector<8x128xf32>
    %103 = arith.mulf %87, %95 : vector<8x128xf32>
    %104 = arith.addf %102, %103 : vector<8x128xf32>
    %105 = math.tanh %104 : vector<8x128xf32>
    %106 = arith.mulf %101, %105 : vector<8x128xf32>
    %107 = vector.extract_strided_slice %10 {offsets = [1, 0, 0], sizes = [1, 8, 128], strides = [1, 1, 1]} : vector<8x8x128xi1> to vector<1x8x128xi1>
    %108 = vector.shape_cast %107 : vector<1x8x128xi1> to vector<8x128xi1>
    %109 = arith.select %108, %106, %76 : vector<8x128xi1>, vector<8x128xf32>
    %110 = arith.select %108, %104, %77 : vector<8x128xi1>, vector<8x128xf32>
    %c16 = arith.constant 16 : index
    %c0_33 = arith.constant 0 : index
    %111 = vector.load %arg14[%c16, %c0_33] : memref<64x512xf32, #tpu.memory_space<vmem>>, vector<8x512xf32>
    %c0_34 = arith.constant 0 : index
    %c0_35 = arith.constant 0 : index
    %112 = vector.load %arg5[%c0_34, %c0_35] : memref<128x512xf32, #tpu.memory_space<vmem>>, vector<128x512xf32>
    %cst_36 = arith.constant dense<0.000000e+00> : vector<8x512xf32>
    %113 = tpu.matmul %109, %112, %cst_36 {dimension_numbers = #tpu.dot_dimension_numbers<[1], [0], [0], [1], [0, 0, 1, 1], [], []>} : vector<8x128xf32>, vector<128x512xf32>, vector<8x512xf32> -> vector<8x512xf32>
    %114 = arith.addf %111, %113 : vector<8x512xf32>
    %115 = vector.extract_strided_slice %114 {offsets = [0, 0], sizes = [8, 128], strides = [1, 1]} : vector<8x512xf32> to vector<8x128xf32>
    %116 = arith.negf %115 : vector<8x128xf32>
    %117 = math.exp %116 : vector<8x128xf32>
    %cst_37 = arith.constant 1.000000e+00 : f32
    %118 = vector.broadcast %cst_37 : f32 to vector<8x128xf32>
    %119 = arith.addf %118, %117 : vector<8x128xf32>
    %120 = arith.divf %118, %119 : vector<8x128xf32>
    %121 = vector.extract_strided_slice %114 {offsets = [0, 128], sizes = [8, 128], strides = [1, 1]} : vector<8x512xf32> to vector<8x128xf32>
    %122 = arith.negf %121 : vector<8x128xf32>
    %123 = math.exp %122 : vector<8x128xf32>
    %cst_38 = arith.constant 1.000000e+00 : f32
    %124 = vector.broadcast %cst_38 : f32 to vector<8x128xf32>
    %125 = arith.addf %124, %123 : vector<8x128xf32>
    %126 = arith.divf %124, %125 : vector<8x128xf32>
    %127 = vector.extract_strided_slice %114 {offsets = [0, 256], sizes = [8, 128], strides = [1, 1]} : vector<8x512xf32> to vector<8x128xf32>
    %128 = math.tanh %127 : vector<8x128xf32>
    %129 = vector.extract_strided_slice %114 {offsets = [0, 384], sizes = [8, 128], strides = [1, 1]} : vector<8x512xf32> to vector<8x128xf32>
    %130 = arith.negf %129 : vector<8x128xf32>
    %131 = math.exp %130 : vector<8x128xf32>
    %cst_39 = arith.constant 1.000000e+00 : f32
    %132 = vector.broadcast %cst_39 : f32 to vector<8x128xf32>
    %133 = arith.addf %132, %131 : vector<8x128xf32>
    %134 = arith.divf %132, %133 : vector<8x128xf32>
    %135 = arith.mulf %126, %110 : vector<8x128xf32>
    %136 = arith.mulf %120, %128 : vector<8x128xf32>
    %137 = arith.addf %135, %136 : vector<8x128xf32>
    %138 = math.tanh %137 : vector<8x128xf32>
    %139 = arith.mulf %134, %138 : vector<8x128xf32>
    %140 = vector.extract_strided_slice %10 {offsets = [2, 0, 0], sizes = [1, 8, 128], strides = [1, 1, 1]} : vector<8x8x128xi1> to vector<1x8x128xi1>
    %141 = vector.shape_cast %140 : vector<1x8x128xi1> to vector<8x128xi1>
    %142 = arith.select %141, %139, %109 : vector<8x128xi1>, vector<8x128xf32>
    %143 = arith.select %141, %137, %110 : vector<8x128xi1>, vector<8x128xf32>
    %c24 = arith.constant 24 : index
    %c0_40 = arith.constant 0 : index
    %144 = vector.load %arg14[%c24, %c0_40] : memref<64x512xf32, #tpu.memory_space<vmem>>, vector<8x512xf32>
    %c0_41 = arith.constant 0 : index
    %c0_42 = arith.constant 0 : index
    %145 = vector.load %arg5[%c0_41, %c0_42] : memref<128x512xf32, #tpu.memory_space<vmem>>, vector<128x512xf32>
    %cst_43 = arith.constant dense<0.000000e+00> : vector<8x512xf32>
    %146 = tpu.matmul %142, %145, %cst_43 {dimension_numbers = #tpu.dot_dimension_numbers<[1], [0], [0], [1], [0, 0, 1, 1], [], []>} : vector<8x128xf32>, vector<128x512xf32>, vector<8x512xf32> -> vector<8x512xf32>
    %147 = arith.addf %144, %146 : vector<8x512xf32>
    %148 = vector.extract_strided_slice %147 {offsets = [0, 0], sizes = [8, 128], strides = [1, 1]} : vector<8x512xf32> to vector<8x128xf32>
    %149 = arith.negf %148 : vector<8x128xf32>
    %150 = math.exp %149 : vector<8x128xf32>
    %cst_44 = arith.constant 1.000000e+00 : f32
    %151 = vector.broadcast %cst_44 : f32 to vector<8x128xf32>
    %152 = arith.addf %151, %150 : vector<8x128xf32>
    %153 = arith.divf %151, %152 : vector<8x128xf32>
    %154 = vector.extract_strided_slice %147 {offsets = [0, 128], sizes = [8, 128], strides = [1, 1]} : vector<8x512xf32> to vector<8x128xf32>
    %155 = arith.negf %154 : vector<8x128xf32>
    %156 = math.exp %155 : vector<8x128xf32>
    %cst_45 = arith.constant 1.000000e+00 : f32
    %157 = vector.broadcast %cst_45 : f32 to vector<8x128xf32>
    %158 = arith.addf %157, %156 : vector<8x128xf32>
    %159 = arith.divf %157, %158 : vector<8x128xf32>
    %160 = vector.extract_strided_slice %147 {offsets = [0, 256], sizes = [8, 128], strides = [1, 1]} : vector<8x512xf32> to vector<8x128xf32>
    %161 = math.tanh %160 : vector<8x128xf32>
    %162 = vector.extract_strided_slice %147 {offsets = [0, 384], sizes = [8, 128], strides = [1, 1]} : vector<8x512xf32> to vector<8x128xf32>
    %163 = arith.negf %162 : vector<8x128xf32>
    %164 = math.exp %163 : vector<8x128xf32>
    %cst_46 = arith.constant 1.000000e+00 : f32
    %165 = vector.broadcast %cst_46 : f32 to vector<8x128xf32>
    %166 = arith.addf %165, %164 : vector<8x128xf32>
    %167 = arith.divf %165, %166 : vector<8x128xf32>
    %168 = arith.mulf %159, %143 : vector<8x128xf32>
    %169 = arith.mulf %153, %161 : vector<8x128xf32>
    %170 = arith.addf %168, %169 : vector<8x128xf32>
    %171 = math.tanh %170 : vector<8x128xf32>
    %172 = arith.mulf %167, %171 : vector<8x128xf32>
    %173 = vector.extract_strided_slice %10 {offsets = [3, 0, 0], sizes = [1, 8, 128], strides = [1, 1, 1]} : vector<8x8x128xi1> to vector<1x8x128xi1>
    %174 = vector.shape_cast %173 : vector<1x8x128xi1> to vector<8x128xi1>
    %175 = arith.select %174, %172, %142 : vector<8x128xi1>, vector<8x128xf32>
    %176 = arith.select %174, %170, %143 : vector<8x128xi1>, vector<8x128xf32>
    %c32 = arith.constant 32 : index
    %c0_47 = arith.constant 0 : index
    %177 = vector.load %arg14[%c32, %c0_47] : memref<64x512xf32, #tpu.memory_space<vmem>>, vector<8x512xf32>
    %c0_48 = arith.constant 0 : index
    %c0_49 = arith.constant 0 : index
    %178 = vector.load %arg5[%c0_48, %c0_49] : memref<128x512xf32, #tpu.memory_space<vmem>>, vector<128x512xf32>
    %cst_50 = arith.constant dense<0.000000e+00> : vector<8x512xf32>
    %179 = tpu.matmul %175, %178, %cst_50 {dimension_numbers = #tpu.dot_dimension_numbers<[1], [0], [0], [1], [0, 0, 1, 1], [], []>} : vector<8x128xf32>, vector<128x512xf32>, vector<8x512xf32> -> vector<8x512xf32>
    %180 = arith.addf %177, %179 : vector<8x512xf32>
    %181 = vector.extract_strided_slice %180 {offsets = [0, 0], sizes = [8, 128], strides = [1, 1]} : vector<8x512xf32> to vector<8x128xf32>
    %182 = arith.negf %181 : vector<8x128xf32>
    %183 = math.exp %182 : vector<8x128xf32>
    %cst_51 = arith.constant 1.000000e+00 : f32
    %184 = vector.broadcast %cst_51 : f32 to vector<8x128xf32>
    %185 = arith.addf %184, %183 : vector<8x128xf32>
    %186 = arith.divf %184, %185 : vector<8x128xf32>
    %187 = vector.extract_strided_slice %180 {offsets = [0, 128], sizes = [8, 128], strides = [1, 1]} : vector<8x512xf32> to vector<8x128xf32>
    %188 = arith.negf %187 : vector<8x128xf32>
    %189 = math.exp %188 : vector<8x128xf32>
    %cst_52 = arith.constant 1.000000e+00 : f32
    %190 = vector.broadcast %cst_52 : f32 to vector<8x128xf32>
    %191 = arith.addf %190, %189 : vector<8x128xf32>
    %192 = arith.divf %190, %191 : vector<8x128xf32>
    %193 = vector.extract_strided_slice %180 {offsets = [0, 256], sizes = [8, 128], strides = [1, 1]} : vector<8x512xf32> to vector<8x128xf32>
    %194 = math.tanh %193 : vector<8x128xf32>
    %195 = vector.extract_strided_slice %180 {offsets = [0, 384], sizes = [8, 128], strides = [1, 1]} : vector<8x512xf32> to vector<8x128xf32>
    %196 = arith.negf %195 : vector<8x128xf32>
    %197 = math.exp %196 : vector<8x128xf32>
    %cst_53 = arith.constant 1.000000e+00 : f32
    %198 = vector.broadcast %cst_53 : f32 to vector<8x128xf32>
    %199 = arith.addf %198, %197 : vector<8x128xf32>
    %200 = arith.divf %198, %199 : vector<8x128xf32>
    %201 = arith.mulf %192, %176 : vector<8x128xf32>
    %202 = arith.mulf %186, %194 : vector<8x128xf32>
    %203 = arith.addf %201, %202 : vector<8x128xf32>
    %204 = math.tanh %203 : vector<8x128xf32>
    %205 = arith.mulf %200, %204 : vector<8x128xf32>
    %206 = vector.extract_strided_slice %10 {offsets = [4, 0, 0], sizes = [1, 8, 128], strides = [1, 1, 1]} : vector<8x8x128xi1> to vector<1x8x128xi1>
    %207 = vector.shape_cast %206 : vector<1x8x128xi1> to vector<8x128xi1>
    %208 = arith.select %207, %205, %175 : vector<8x128xi1>, vector<8x128xf32>
    %209 = arith.select %207, %203, %176 : vector<8x128xi1>, vector<8x128xf32>
    %c40 = arith.constant 40 : index
    %c0_54 = arith.constant 0 : index
    %210 = vector.load %arg14[%c40, %c0_54] : memref<64x512xf32, #tpu.memory_space<vmem>>, vector<8x512xf32>
    %c0_55 = arith.constant 0 : index
    %c0_56 = arith.constant 0 : index
    %211 = vector.load %arg5[%c0_55, %c0_56] : memref<128x512xf32, #tpu.memory_space<vmem>>, vector<128x512xf32>
    %cst_57 = arith.constant dense<0.000000e+00> : vector<8x512xf32>
    %212 = tpu.matmul %208, %211, %cst_57 {dimension_numbers = #tpu.dot_dimension_numbers<[1], [0], [0], [1], [0, 0, 1, 1], [], []>} : vector<8x128xf32>, vector<128x512xf32>, vector<8x512xf32> -> vector<8x512xf32>
    %213 = arith.addf %210, %212 : vector<8x512xf32>
    %214 = vector.extract_strided_slice %213 {offsets = [0, 0], sizes = [8, 128], strides = [1, 1]} : vector<8x512xf32> to vector<8x128xf32>
    %215 = arith.negf %214 : vector<8x128xf32>
    %216 = math.exp %215 : vector<8x128xf32>
    %cst_58 = arith.constant 1.000000e+00 : f32
    %217 = vector.broadcast %cst_58 : f32 to vector<8x128xf32>
    %218 = arith.addf %217, %216 : vector<8x128xf32>
    %219 = arith.divf %217, %218 : vector<8x128xf32>
    %220 = vector.extract_strided_slice %213 {offsets = [0, 128], sizes = [8, 128], strides = [1, 1]} : vector<8x512xf32> to vector<8x128xf32>
    %221 = arith.negf %220 : vector<8x128xf32>
    %222 = math.exp %221 : vector<8x128xf32>
    %cst_59 = arith.constant 1.000000e+00 : f32
    %223 = vector.broadcast %cst_59 : f32 to vector<8x128xf32>
    %224 = arith.addf %223, %222 : vector<8x128xf32>
    %225 = arith.divf %223, %224 : vector<8x128xf32>
    %226 = vector.extract_strided_slice %213 {offsets = [0, 256], sizes = [8, 128], strides = [1, 1]} : vector<8x512xf32> to vector<8x128xf32>
    %227 = math.tanh %226 : vector<8x128xf32>
    %228 = vector.extract_strided_slice %213 {offsets = [0, 384], sizes = [8, 128], strides = [1, 1]} : vector<8x512xf32> to vector<8x128xf32>
    %229 = arith.negf %228 : vector<8x128xf32>
    %230 = math.exp %229 : vector<8x128xf32>
    %cst_60 = arith.constant 1.000000e+00 : f32
    %231 = vector.broadcast %cst_60 : f32 to vector<8x128xf32>
    %232 = arith.addf %231, %230 : vector<8x128xf32>
    %233 = arith.divf %231, %232 : vector<8x128xf32>
    %234 = arith.mulf %225, %209 : vector<8x128xf32>
    %235 = arith.mulf %219, %227 : vector<8x128xf32>
    %236 = arith.addf %234, %235 : vector<8x128xf32>
    %237 = math.tanh %236 : vector<8x128xf32>
    %238 = arith.mulf %233, %237 : vector<8x128xf32>
    %239 = vector.extract_strided_slice %10 {offsets = [5, 0, 0], sizes = [1, 8, 128], strides = [1, 1, 1]} : vector<8x8x128xi1> to vector<1x8x128xi1>
    %240 = vector.shape_cast %239 : vector<1x8x128xi1> to vector<8x128xi1>
    %241 = arith.select %240, %238, %208 : vector<8x128xi1>, vector<8x128xf32>
    %242 = arith.select %240, %236, %209 : vector<8x128xi1>, vector<8x128xf32>
    %c48 = arith.constant 48 : index
    %c0_61 = arith.constant 0 : index
    %243 = vector.load %arg14[%c48, %c0_61] : memref<64x512xf32, #tpu.memory_space<vmem>>, vector<8x512xf32>
    %c0_62 = arith.constant 0 : index
    %c0_63 = arith.constant 0 : index
    %244 = vector.load %arg5[%c0_62, %c0_63] : memref<128x512xf32, #tpu.memory_space<vmem>>, vector<128x512xf32>
    %cst_64 = arith.constant dense<0.000000e+00> : vector<8x512xf32>
    %245 = tpu.matmul %241, %244, %cst_64 {dimension_numbers = #tpu.dot_dimension_numbers<[1], [0], [0], [1], [0, 0, 1, 1], [], []>} : vector<8x128xf32>, vector<128x512xf32>, vector<8x512xf32> -> vector<8x512xf32>
    %246 = arith.addf %243, %245 : vector<8x512xf32>
    %247 = vector.extract_strided_slice %246 {offsets = [0, 0], sizes = [8, 128], strides = [1, 1]} : vector<8x512xf32> to vector<8x128xf32>
    %248 = arith.negf %247 : vector<8x128xf32>
    %249 = math.exp %248 : vector<8x128xf32>
    %cst_65 = arith.constant 1.000000e+00 : f32
    %250 = vector.broadcast %cst_65 : f32 to vector<8x128xf32>
    %251 = arith.addf %250, %249 : vector<8x128xf32>
    %252 = arith.divf %250, %251 : vector<8x128xf32>
    %253 = vector.extract_strided_slice %246 {offsets = [0, 128], sizes = [8, 128], strides = [1, 1]} : vector<8x512xf32> to vector<8x128xf32>
    %254 = arith.negf %253 : vector<8x128xf32>
    %255 = math.exp %254 : vector<8x128xf32>
    %cst_66 = arith.constant 1.000000e+00 : f32
    %256 = vector.broadcast %cst_66 : f32 to vector<8x128xf32>
    %257 = arith.addf %256, %255 : vector<8x128xf32>
    %258 = arith.divf %256, %257 : vector<8x128xf32>
    %259 = vector.extract_strided_slice %246 {offsets = [0, 256], sizes = [8, 128], strides = [1, 1]} : vector<8x512xf32> to vector<8x128xf32>
    %260 = math.tanh %259 : vector<8x128xf32>
    %261 = vector.extract_strided_slice %246 {offsets = [0, 384], sizes = [8, 128], strides = [1, 1]} : vector<8x512xf32> to vector<8x128xf32>
    %262 = arith.negf %261 : vector<8x128xf32>
    %263 = math.exp %262 : vector<8x128xf32>
    %cst_67 = arith.constant 1.000000e+00 : f32
    %264 = vector.broadcast %cst_67 : f32 to vector<8x128xf32>
    %265 = arith.addf %264, %263 : vector<8x128xf32>
    %266 = arith.divf %264, %265 : vector<8x128xf32>
    %267 = arith.mulf %258, %242 : vector<8x128xf32>
    %268 = arith.mulf %252, %260 : vector<8x128xf32>
    %269 = arith.addf %267, %268 : vector<8x128xf32>
    %270 = math.tanh %269 : vector<8x128xf32>
    %271 = arith.mulf %266, %270 : vector<8x128xf32>
    %272 = vector.extract_strided_slice %10 {offsets = [6, 0, 0], sizes = [1, 8, 128], strides = [1, 1, 1]} : vector<8x8x128xi1> to vector<1x8x128xi1>
    %273 = vector.shape_cast %272 : vector<1x8x128xi1> to vector<8x128xi1>
    %274 = arith.select %273, %271, %241 : vector<8x128xi1>, vector<8x128xf32>
    %275 = arith.select %273, %269, %242 : vector<8x128xi1>, vector<8x128xf32>
    %c56 = arith.constant 56 : index
    %c0_68 = arith.constant 0 : index
    %276 = vector.load %arg14[%c56, %c0_68] : memref<64x512xf32, #tpu.memory_space<vmem>>, vector<8x512xf32>
    %c0_69 = arith.constant 0 : index
    %c0_70 = arith.constant 0 : index
    %277 = vector.load %arg5[%c0_69, %c0_70] : memref<128x512xf32, #tpu.memory_space<vmem>>, vector<128x512xf32>
    %cst_71 = arith.constant dense<0.000000e+00> : vector<8x512xf32>
    %278 = tpu.matmul %274, %277, %cst_71 {dimension_numbers = #tpu.dot_dimension_numbers<[1], [0], [0], [1], [0, 0, 1, 1], [], []>} : vector<8x128xf32>, vector<128x512xf32>, vector<8x512xf32> -> vector<8x512xf32>
    %279 = arith.addf %276, %278 : vector<8x512xf32>
    %280 = vector.extract_strided_slice %279 {offsets = [0, 0], sizes = [8, 128], strides = [1, 1]} : vector<8x512xf32> to vector<8x128xf32>
    %281 = arith.negf %280 : vector<8x128xf32>
    %282 = math.exp %281 : vector<8x128xf32>
    %cst_72 = arith.constant 1.000000e+00 : f32
    %283 = vector.broadcast %cst_72 : f32 to vector<8x128xf32>
    %284 = arith.addf %283, %282 : vector<8x128xf32>
    %285 = arith.divf %283, %284 : vector<8x128xf32>
    %286 = vector.extract_strided_slice %279 {offsets = [0, 128], sizes = [8, 128], strides = [1, 1]} : vector<8x512xf32> to vector<8x128xf32>
    %287 = arith.negf %286 : vector<8x128xf32>
    %288 = math.exp %287 : vector<8x128xf32>
    %cst_73 = arith.constant 1.000000e+00 : f32
    %289 = vector.broadcast %cst_73 : f32 to vector<8x128xf32>
    %290 = arith.addf %289, %288 : vector<8x128xf32>
    %291 = arith.divf %289, %290 : vector<8x128xf32>
    %292 = vector.extract_strided_slice %279 {offsets = [0, 256], sizes = [8, 128], strides = [1, 1]} : vector<8x512xf32> to vector<8x128xf32>
    %293 = math.tanh %292 : vector<8x128xf32>
    %294 = vector.extract_strided_slice %279 {offsets = [0, 384], sizes = [8, 128], strides = [1, 1]} : vector<8x512xf32> to vector<8x128xf32>
    %295 = arith.negf %294 : vector<8x128xf32>
    %296 = math.exp %295 : vector<8x128xf32>
    %cst_74 = arith.constant 1.000000e+00 : f32
    %297 = vector.broadcast %cst_74 : f32 to vector<8x128xf32>
    %298 = arith.addf %297, %296 : vector<8x128xf32>
    %299 = arith.divf %297, %298 : vector<8x128xf32>
    %300 = arith.mulf %291, %275 : vector<8x128xf32>
    %301 = arith.mulf %285, %293 : vector<8x128xf32>
    %302 = arith.addf %300, %301 : vector<8x128xf32>
    %303 = math.tanh %302 : vector<8x128xf32>
    %304 = arith.mulf %299, %303 : vector<8x128xf32>
    %305 = vector.extract_strided_slice %10 {offsets = [7, 0, 0], sizes = [1, 8, 128], strides = [1, 1, 1]} : vector<8x8x128xi1> to vector<1x8x128xi1>
    %306 = vector.shape_cast %305 : vector<1x8x128xi1> to vector<8x128xi1>
    %307 = arith.select %306, %304, %274 : vector<8x128xi1>, vector<8x128xf32>
    %c0_75 = arith.constant 0 : index
    %c0_76 = arith.constant 0 : index
    %308 = vector.load %arg0[%c0_75, %c0_76] : memref<8x8xf32, #tpu.memory_space<vmem>>, vector<8x8xf32>
    %cst_77 = arith.constant dense<0.000000e+00> : vector<8x128xf32>
    %309 = tpu.matmul %308, %307, %cst_77 {dimension_numbers = #tpu.dot_dimension_numbers<[1], [0], [0], [1], [0, 0, 1, 1], [], []>} : vector<8x8xf32>, vector<8x128xf32>, vector<8x128xf32> -> vector<8x128xf32>
    %c0_78 = arith.constant 0 : index
    %c0_79 = arith.constant 0 : index
    %310 = vector.load %arg7[%c0_78, %c0_79] : memref<128x64xf32, #tpu.memory_space<vmem>>, vector<128x64xf32>
    %cst_80 = arith.constant dense<0.000000e+00> : vector<8x64xf32>
    %311 = tpu.matmul %309, %310, %cst_80 {dimension_numbers = #tpu.dot_dimension_numbers<[1], [0], [0], [1], [0, 0, 1, 1], [], []>} : vector<8x128xf32>, vector<128x64xf32>, vector<8x64xf32> -> vector<8x64xf32>
    %c0_81 = arith.constant 0 : index
    %c0_82 = arith.constant 0 : index
    %312 = vector.load %arg8[%c0_81, %c0_82] : memref<1x64xf32, #tpu.memory_space<vmem>>, vector<1x64xf32>
    %313 = vector.broadcast %312 : vector<1x64xf32> to vector<8x64xf32>
    %314 = arith.addf %311, %313 : vector<8x64xf32>
    %cst_83 = arith.constant 0.000000e+00 : f32
    %315 = vector.broadcast %cst_83 : f32 to vector<8x64xf32>
    %316 = arith.maximumf %314, %315 : vector<8x64xf32>
    %c0_84 = arith.constant 0 : index
    %c0_85 = arith.constant 0 : index
    %317 = vector.load %arg9[%c0_84, %c0_85] : memref<64x32xf32, #tpu.memory_space<vmem>>, vector<64x32xf32>
    %cst_86 = arith.constant dense<0.000000e+00> : vector<8x32xf32>
    %318 = tpu.matmul %316, %317, %cst_86 {dimension_numbers = #tpu.dot_dimension_numbers<[1], [0], [0], [1], [0, 0, 1, 1], [], []>} : vector<8x64xf32>, vector<64x32xf32>, vector<8x32xf32> -> vector<8x32xf32>
    %c0_87 = arith.constant 0 : index
    %c0_88 = arith.constant 0 : index
    %319 = vector.load %arg10[%c0_87, %c0_88] : memref<1x32xf32, #tpu.memory_space<vmem>>, vector<1x32xf32>
    %320 = vector.broadcast %319 : vector<1x32xf32> to vector<8x32xf32>
    %321 = arith.addf %318, %320 : vector<8x32xf32>
    %cst_89 = arith.constant 0.000000e+00 : f32
    %322 = vector.broadcast %cst_89 : f32 to vector<8x32xf32>
    %323 = arith.maximumf %321, %322 : vector<8x32xf32>
    %c0_90 = arith.constant 0 : index
    %c0_91 = arith.constant 0 : index
    %324 = vector.load %arg11[%c0_90, %c0_91] : memref<32x128xf32, #tpu.memory_space<vmem>>, vector<32x128xf32>
    %cst_92 = arith.constant dense<0.000000e+00> : vector<8x128xf32>
    %325 = tpu.matmul %323, %324, %cst_92 {dimension_numbers = #tpu.dot_dimension_numbers<[1], [0], [0], [1], [0, 0, 1, 1], [], []>} : vector<8x32xf32>, vector<32x128xf32>, vector<8x128xf32> -> vector<8x128xf32>
    %c0_93 = arith.constant 0 : index
    %c0_94 = arith.constant 0 : index
    %326 = vector.load %arg12[%c0_93, %c0_94] : memref<1x128xf32, #tpu.memory_space<vmem>>, vector<1x128xf32>
    %327 = vector.broadcast %326 : vector<1x128xf32> to vector<8x128xf32>
    %328 = arith.addf %325, %327 : vector<8x128xf32>
    %cst_95 = arith.constant 0.000000e+00 : f32
    %329 = vector.broadcast %cst_95 : f32 to vector<8x128xf32>
    %330 = arith.maximumf %328, %329 : vector<8x128xf32>
    %c0_96 = arith.constant 0 : index
    %c0_97 = arith.constant 0 : index
    %331 = vector.load %arg13[%c0_96, %c0_97] : memref<8x128xf32, #tpu.memory_space<vmem>>, vector<8x128xf32>
    tpu.vector_store %arg13[%c0_96, %c0_97], %330 {strides = array<i32>} : memref<8x128xf32, #tpu.memory_space<vmem>>, vector<8x128xf32>,
    return
  }
}

</mosaic_0001>

<llo_original>
// kernel: lstm_discriminator_forward.1
$region0: #{lstm_discriminator_forward.1}
  #allocation0 [shape = 'u32[]', space=smem, size = 0x4, offset = 0x4, fixed_abs, tag = 'smem constant byte address 0x4 - core index']
  #allocation1 [shape = 'u32[144,128]{1,0:T(1,128)}', space=vmem, size = 0x12000, scoped, tag = 'internal scratch']
  #allocation2 [shape = 'f32[64,512]{1,0:T(8,128)}', space=vmem, size = 0x20000, scoped, tag = 'scratch operand']
  %s0 = inlined_call_operand.vmem [shape: f32[8,8], index: 0, kind: input, shape index: {}]
  %s1 = inlined_call_operand.vmem [shape: f32[9,8,2], index: 1, kind: input, shape index: {}]
  %s2 = inlined_call_operand.vmem [shape: f32[2,64], index: 2, kind: input, shape index: {}]
  %s3 = inlined_call_operand.vmem [shape: f32[1,64], index: 3, kind: input, shape index: {}]
  %s4 = inlined_call_operand.hbm [shape: f32[64,512], index: 4, kind: input, shape index: {}]
  %s5 = inlined_call_operand.vmem [shape: f32[128,512], index: 5, kind: input, shape index: {}]
  %s6 = inlined_call_operand.vmem [shape: f32[1,512], index: 6, kind: input, shape index: {}]
  %s7 = inlined_call_operand.vmem [shape: f32[128,64], index: 7, kind: input, shape index: {}]
  %s8 = inlined_call_operand.vmem [shape: f32[1,64], index: 8, kind: input, shape index: {}]
  %s9 = inlined_call_operand.vmem [shape: f32[64,32], index: 9, kind: input, shape index: {}]
  %s10 = inlined_call_operand.vmem [shape: f32[1,32], index: 10, kind: input, shape index: {}]
  %s11 = inlined_call_operand.vmem [shape: f32[32,128], index: 11, kind: input, shape index: {}]
  %s12 = inlined_call_operand.vmem [shape: f32[1,128], index: 12, kind: input, shape index: {}]
  %s13 = inlined_call_operand.vmem [shape: f32[8,128], index: 13, kind: output, shape index: {}]
  %s14 = sld [smem:[#allocation0]]
  $region66: #{lstm_discriminator_forward.1} parent=0
    _
  %s16 = ssub.s32 1, %s14
  %s17 = scalar_select 0, %s16, %s14
  $region1: #{lstm_discriminator_forward.1} parent=0
    #allocation3 [shape = 'u8[131072]{0}', space=vmem, size = 0x20000, scoped, tag = 'input window, operand 4, single buffered']
    #allocation4 [shape = 's32[1]{0}', space=sflag, size = 0x4, scoped, tag = 'scoped memory for lstm_discriminator_forward.1']
    %18 = vsyncpa [#allocation4], 0
    // Predicated region
    $region2: #{lstm_discriminator_forward.1} parent=1 // pred_check
      _
    $region3: #{lstm_discriminator_forward.1} parent=1 // pred_check_branch
      %20 = sbr.rel (0) target = $region5
    $region4: #{lstm_discriminator_forward.1} parent=1 // pred_region
      _
    $region5: #{lstm_discriminator_forward.1} parent=1 // pred_fallthru
      _
    // Predicated region
    $region6: #{lstm_discriminator_forward.1} parent=1 // pred_check
      _
    $region7: #{lstm_discriminator_forward.1} parent=1 // pred_check_branch
      %22 = sbr.rel (0) target = $region9
    $region8: #{lstm_discriminator_forward.1} parent=1 // pred_region
      _
    $region9: #{lstm_discriminator_forward.1} parent=1 // pred_fallthru
      _
    // Predicated region
    $region10: #{lstm_discriminator_forward.1} parent=1 // pred_check
      _
    $region11: #{lstm_discriminator_forward.1} parent=1 // pred_check_branch
      %24 = sbr.rel (0) target = $region13
    $region12: #{lstm_discriminator_forward.1} parent=1 // pred_region
      _
    $region13: #{lstm_discriminator_forward.1} parent=1 // pred_fallthru
      _
    // Predicated region
    $region14: #{lstm_discriminator_forward.1} parent=1 // pred_check
      _
    $region15: #{lstm_discriminator_forward.1} parent=1 // pred_check_branch
      %26 = sbr.rel (0) target = $region17
    $region16: #{lstm_discriminator_forward.1} parent=1 // pred_region
      _
    $region17: #{lstm_discriminator_forward.1} parent=1 // pred_fallthru
      _
    // Predicated region
    $region18: #{lstm_discriminator_forward.1} parent=1 // pred_check
      _
    $region19: #{lstm_discriminator_forward.1} parent=1 // pred_check_branch
      %28 = sbr.rel (0) target = $region21
    $region20: #{lstm_discriminator_forward.1} parent=1 // pred_region
      %s30 = ssub.s32 4096, 4096
      %31 = vsyncadd [#allocation4], %s30
      %s32 = sshll.u32 [#allocation3], 4
      %s33 = int_to_ptr.vmem [resolvable:$true] %s32
      %38 = dma.hbm_to_vmem [thread:$0]  %s4, 4096, %s33, [#allocation4], 512, 512, 32
    $region21: #{lstm_discriminator_forward.1} parent=1 // pred_fallthru
      _
    // Predicated region
    $region22: #{lstm_discriminator_forward.1} parent=1 // pred_check
      _
    $region23: #{lstm_discriminator_forward.1} parent=1 // pred_check_branch
      %40 = sbr.rel (0) target = $region25
    $region24: #{lstm_discriminator_forward.1} parent=1 // pred_region
      _
    $region25: #{lstm_discriminator_forward.1} parent=1 // pred_fallthru
      _
    // Predicated region
    $region26: #{lstm_discriminator_forward.1} parent=1 // pred_check
      _
    $region27: #{lstm_discriminator_forward.1} parent=1 // pred_check_branch
      %42 = sbr.rel (0) target = $region29
    $region28: #{lstm_discriminator_forward.1} parent=1 // pred_region
      _
    $region29: #{lstm_discriminator_forward.1} parent=1 // pred_fallthru
      _
    // Predicated region
    $region30: #{lstm_discriminator_forward.1} parent=1 // pred_check
      _
    $region31: #{lstm_discriminator_forward.1} parent=1 // pred_check_branch
      %44 = sbr.rel (0) target = $region33
    $region32: #{lstm_discriminator_forward.1} parent=1 // pred_region
      _
    $region33: #{lstm_discriminator_forward.1} parent=1 // pred_fallthru
      _
    // Predicated region
    $region34: #{lstm_discriminator_forward.1} parent=1 // pred_check
      _
    $region35: #{lstm_discriminator_forward.1} parent=1 // pred_check_branch
      %46 = sbr.rel (0) target = $region37
    $region36: #{lstm_discriminator_forward.1} parent=1 // pred_region
      _
    $region37: #{lstm_discriminator_forward.1} parent=1 // pred_fallthru
      _
    // Predicated region
    $region38: #{lstm_discriminator_forward.1} parent=1 // pred_check
      _
    $region39: #{lstm_discriminator_forward.1} parent=1 // pred_check_branch
      %48 = sbr.rel (0) target = $region41
    $region40: #{lstm_discriminator_forward.1} parent=1 // pred_region
      _
    $region41: #{lstm_discriminator_forward.1} parent=1 // pred_fallthru
      _
    // Predicated region
    $region42: #{lstm_discriminator_forward.1} parent=1 // pred_check
      _
    $region43: #{lstm_discriminator_forward.1} parent=1 // pred_check_branch
      %50 = sbr.rel (0) target = $region45
    $region44: #{lstm_discriminator_forward.1} parent=1 // pred_region
      _
    $region45: #{lstm_discriminator_forward.1} parent=1 // pred_fallthru
      _
    // Predicated region
    $region46: #{lstm_discriminator_forward.1} parent=1 // pred_check
      _
    $region47: #{lstm_discriminator_forward.1} parent=1 // pred_check_branch
      %52 = sbr.rel (0) target = $region49
    $region48: #{lstm_discriminator_forward.1} parent=1 // pred_region
      _
    $region49: #{lstm_discriminator_forward.1} parent=1 // pred_fallthru
      _
    // Predicated region
    $region50: #{lstm_discriminator_forward.1} parent=1 // pred_check
      _
    $region51: #{lstm_discriminator_forward.1} parent=1 // pred_check_branch
      %54 = sbr.rel (0) target = $region53
    $region52: #{lstm_discriminator_forward.1} parent=1 // pred_region
      _
    $region53: #{lstm_discriminator_forward.1} parent=1 // pred_fallthru
      _
    // Predicated region
    $region54: #{lstm_discriminator_forward.1} parent=1 // pred_check
      _
    $region55: #{lstm_discriminator_forward.1} parent=1 // pred_check_branch
      %56 = sbr.rel (0) target = $region57
    $region56: #{lstm_discriminator_forward.1} parent=1 // pred_region
      %57 = dma.done [#allocation4], 4096
    $region57: #{lstm_discriminator_forward.1} parent=1 // pred_fallthru
      _
    %v58 = vld [vmem:[%s1] sm:$0xff]
    %v59 = vld [vmem:[%s1 + $0x8] sm:$0xff]
    %v60 = vld [vmem:[%s1 + $0x10] sm:$0xff]
    %v61 = vld [vmem:[%s1 + $0x18] sm:$0xff]
    %v62 = vld [vmem:[%s1 + $0x20] sm:$0xff]
    %v63 = vld [vmem:[%s1 + $0x28] sm:$0xff]
    %v64 = vld [vmem:[%s1 + $0x30] sm:$0xff]
    %v65 = vld [vmem:[%s1 + $0x38] sm:$0xff]
    %v66 = vld [vmem:[%s1 + $0x40] sm:$0xff]
    %vm67 = vcmp.ne.f32.partialorder %v58, %v58
    %vm68 = vcmp.ne.f32.partialorder %v59, %v59
    %vm69 = vcmp.ne.f32.partialorder %v60, %v60
    %vm70 = vcmp.ne.f32.partialorder %v61, %v61
    %vm71 = vcmp.ne.f32.partialorder %v62, %v62
    %vm72 = vcmp.ne.f32.partialorder %v63, %v63
    %vm73 = vcmp.ne.f32.partialorder %v64, %v64
    %vm74 = vcmp.ne.f32.partialorder %v65, %v65
    %vm75 = vcmp.ne.f32.partialorder %v66, %v66
    %vm76 = vmor %vm67, %vm68
    %vm77 = vmor %vm68, %vm69
    %vm78 = vmor %vm69, %vm70
    %vm79 = vmor %vm70, %vm71
    %vm80 = vmor %vm71, %vm72
    %vm81 = vmor %vm72, %vm73
    %vm82 = vmor %vm73, %vm74
    %vm83 = vmor %vm74, %vm75
    %vm84 = vmxor %vm76, 1
    %vm85 = vmxor %vm77, 1
    %vm86 = vmxor %vm78, 1
    %vm87 = vmxor %vm79, 1
    %vm88 = vmxor %vm80, 1
    %vm89 = vmxor %vm81, 1
    %vm90 = vmxor %vm82, 1
    %vm91 = vmxor %vm83, 1
    %v92 = vsub.f32 %v59, %v58
    %v93 = vsub.f32 %v60, %v59
    %v94 = vsub.f32 %v61, %v60
    %v95 = vsub.f32 %v62, %v61
    %v96 = vsub.f32 %v63, %v62
    %v97 = vsub.f32 %v64, %v63
    %v98 = vsub.f32 %v65, %v64
    %v99 = vsub.f32 %v66, %v65
    %v100 = vmul.f32 %v92, 4.0
    %v101 = vmul.f32 %v93, 4.0
    %v102 = vmul.f32 %v94, 4.0
    %v103 = vmul.f32 %v95, 4.0
    %v104 = vmul.f32 %v96, 4.0
    %v105 = vmul.f32 %v97, 4.0
    %v106 = vmul.f32 %v98, 4.0
    %v107 = vmul.f32 %v99, 4.0
    %v108 = vld [vmem:[%s2] sm:$0x3]
    %110 = vset.pattern.permute.xlu0 0
    %111 = vperm.xlu0 %110, %v100
    %v112 = vpop.permute.xlu0 %111
    %115 = vset.pattern.permute.xlu0 0
    %116 = vperm.xlu0 %115, %v101
    %v117 = vpop.permute.xlu0 %116
    %120 = vset.pattern.permute.xlu0 0
    %121 = vperm.xlu0 %120, %v102
    %v122 = vpop.permute.xlu0 %121
    %125 = vset.pattern.permute.xlu0 0
    %126 = vperm.xlu0 %125, %v103
    %v127 = vpop.permute.xlu0 %126
    %130 = vset.pattern.permute.xlu0 0
    %131 = vperm.xlu0 %130, %v104
    %v132 = vpop.permute.xlu0 %131
    %135 = vset.pattern.permute.xlu0 0
    %136 = vperm.xlu0 %135, %v105
    %v137 = vpop.permute.xlu0 %136
    %140 = vset.pattern.permute.xlu0 0
    %141 = vperm.xlu0 %140, %v106
    %v142 = vpop.permute.xlu0 %141
    %145 = vset.pattern.permute.xlu0 0
    %146 = vperm.xlu0 %145, %v107
    %v147 = vpop.permute.xlu0 %146
    %v149 = vlaneseq
    %v150 = vshrl.u32 %v149, 7
    %v151 = vsub.s32 0, %v150
    %v152 = vrot.slane %v108, %v151
    %v153 = vmul.f32 %v112, %v152
    %v154 = vmul.f32 %v117, %v152
    %v155 = vmul.f32 %v122, %v152
    %v156 = vmul.f32 %v127, %v152
    %v157 = vmul.f32 %v132, %v152
    %v158 = vmul.f32 %v137, %v152
    %v159 = vmul.f32 %v142, %v152
    %v160 = vmul.f32 %v147, %v152
    %161 = vset.pattern.permute.xlu0 1
    %162 = vperm.xlu0 %161, %v100
    %v163 = vpop.permute.xlu0 %162
    %165 = vset.pattern.permute.xlu0 1
    %166 = vperm.xlu0 %165, %v101
    %v167 = vpop.permute.xlu0 %166
    %169 = vset.pattern.permute.xlu0 1
    %170 = vperm.xlu0 %169, %v102
    %v171 = vpop.permute.xlu0 %170
    %173 = vset.pattern.permute.xlu0 1
    %174 = vperm.xlu0 %173, %v103
    %v175 = vpop.permute.xlu0 %174
    %177 = vset.pattern.permute.xlu0 1
    %178 = vperm.xlu0 %177, %v104
    %v179 = vpop.permute.xlu0 %178
    %181 = vset.pattern.permute.xlu0 1
    %182 = vperm.xlu0 %181, %v105
    %v183 = vpop.permute.xlu0 %182
    %185 = vset.pattern.permute.xlu0 1
    %186 = vperm.xlu0 %185, %v106
    %v187 = vpop.permute.xlu0 %186
    %189 = vset.pattern.permute.xlu0 1
    %190 = vperm.xlu0 %189, %v107
    %v191 = vpop.permute.xlu0 %190
    %v193 = vlaneseq
    %v194 = vshrl.u32 %v193, 7
    %v195 = vsub.s32 1, %v194
    %v196 = vrot.slane %v108, %v195
    %v197 = vmul.f32 %v163, %v196
    %v198 = vmul.f32 %v167, %v196
    %v199 = vmul.f32 %v171, %v196
    %v200 = vmul.f32 %v175, %v196
    %v201 = vmul.f32 %v179, %v196
    %v202 = vmul.f32 %v183, %v196
    %v203 = vmul.f32 %v187, %v196
    %v204 = vmul.f32 %v191, %v196
    %v205 = vadd.f32 %v153, %v197
    %v206 = vadd.f32 %v154, %v198
    %v207 = vadd.f32 %v155, %v199
    %v208 = vadd.f32 %v156, %v200
    %v209 = vadd.f32 %v157, %v201
    %v210 = vadd.f32 %v158, %v202
    %v211 = vadd.f32 %v159, %v203
    %v212 = vadd.f32 %v160, %v204
    %v213 = vld [vmem:[%s3] sm:$0x1]
    %v215 = vlaneseq
    %v216 = vshrl.u32 %v215, 7
    %v217 = vsub.s32 0, %v216
    %v218 = vrot.slane %v213, %v217
    %v220 = vadd.f32 %v205, %v218
    %v221 = vadd.f32 %v206, %v218
    %v222 = vadd.f32 %v207, %v218
    %v223 = vadd.f32 %v208, %v218
    %v224 = vadd.f32 %v209, %v218
    %v225 = vadd.f32 %v210, %v218
    %v226 = vadd.f32 %v211, %v218
    %v227 = vadd.f32 %v212, %v218
    %v228 = vmax.f32 %v220, 0.0
    %v229 = vmax.f32 %v221, 0.0
    %v230 = vmax.f32 %v222, 0.0
    %v231 = vmax.f32 %v223, 0.0
    %v232 = vmax.f32 %v224, 0.0
    %v233 = vmax.f32 %v225, 0.0
    %v234 = vmax.f32 %v226, 0.0
    %v235 = vmax.f32 %v227, 0.0
    %v236 = vld [vmem:[#allocation3] sm:$0xff]
    %v237 = vld [vmem:[#allocation3 + $0x8] sm:$0xff]
    %v238 = vld [vmem:[#allocation3 + $0x10] sm:$0xff]
    %v239 = vld [vmem:[#allocation3 + $0x18] sm:$0xff]
    %v240 = vld [vmem:[#allocation3 + $0x20] sm:$0xff]
    %v241 = vld [vmem:[#allocation3 + $0x28] sm:$0xff]
    %v242 = vld [vmem:[#allocation3 + $0x30] sm:$0xff]
    %v243 = vld [vmem:[#allocation3 + $0x38] sm:$0xff]
    %v244 = vld [vmem:[#allocation3 + $0x40] sm:$0xff]
    %v245 = vld [vmem:[#allocation3 + $0x48] sm:$0xff]
    %v246 = vld [vmem:[#allocation3 + $0x50] sm:$0xff]
    %v247 = vld [vmem:[#allocation3 + $0x58] sm:$0xff]
    %v248 = vld [vmem:[#allocation3 + $0x60] sm:$0xff]
    %v249 = vld [vmem:[#allocation3 + $0x68] sm:$0xff]
    %v250 = vld [vmem:[#allocation3 + $0x70] sm:$0xff]
    %v251 = vld [vmem:[#allocation3 + $0x78] sm:$0xff]
    %v252 = vld [vmem:[#allocation3 + $0x80] sm:$0xff]
    %v253 = vld [vmem:[#allocation3 + $0x88] sm:$0xff]
    %v254 = vld [vmem:[#allocation3 + $0x90] sm:$0xff]
    %v255 = vld [vmem:[#allocation3 + $0x98] sm:$0xff]
    %v256 = vld [vmem:[#allocation3 + $0xa0] sm:$0xff]
    %v257 = vld [vmem:[#allocation3 + $0xa8] sm:$0xff]
    %v258 = vld [vmem:[#allocation3 + $0xb0] sm:$0xff]
    %v259 = vld [vmem:[#allocation3 + $0xb8] sm:$0xff]
    %v260 = vld [vmem:[#allocation3 + $0xc0] sm:$0xff]
    %v261 = vld [vmem:[#allocation3 + $0xc8] sm:$0xff]
    %v262 = vld [vmem:[#allocation3 + $0xd0] sm:$0xff]
    %v263 = vld [vmem:[#allocation3 + $0xd8] sm:$0xff]
    %v264 = vld [vmem:[#allocation3 + $0xe0] sm:$0xff]
    %v265 = vld [vmem:[#allocation3 + $0xe8] sm:$0xff]
    %v266 = vld [vmem:[#allocation3 + $0xf0] sm:$0xff]
    %v267 = vld [vmem:[#allocation3 + $0xf8] sm:$0xff]
    %v268 = vld [vmem:[%s6] sm:$0xf]
    %v270 = vlaneseq
    %v271 = vshrl.u32 %v270, 7
    %v272 = vsub.s32 0, %v271
    %v273 = vrot.slane %v268, %v272
    %v274 = vlaneseq
    %v275 = vshrl.u32 %v274, 7
    %v276 = vsub.s32 1, %v275
    %v277 = vrot.slane %v268, %v276
    %v278 = vlaneseq
    %v279 = vshrl.u32 %v278, 7
    %v280 = vsub.s32 2, %v279
    %v281 = vrot.slane %v268, %v280
    %v282 = vlaneseq
    %v283 = vshrl.u32 %v282, 7
    %v284 = vsub.s32 3, %v283
    %v285 = vrot.slane %v268, %v284
    %vm290 = vcmask 523264
    %v292 = vsel %vm290, %v228, 0
    %v295 = vsel %vm290, %v229, 0
    %v298 = vsel %vm290, %v230, 0
    %v301 = vsel %vm290, %v231, 0
    %v304 = vsel %vm290, %v232, 0
    %v307 = vsel %vm290, %v233, 0
    %v310 = vsel %vm290, %v234, 0
    %v313 = vsel %vm290, %v235, 0
    %315 = vmatprep.subr.mxu0 %v237
    %316 = vmatpush1.msra.mxu0 %v236
    %317 = vmatprep.subr.mxu0 %v241
    %318 = vmatpush1.msra.mxu0 %v240
    %319 = vmatprep.subr.mxu0 %v245
    %320 = vmatpush1.msra.mxu0 %v244
    %321 = vmatprep.subr.mxu0 %v249
    %322 = vmatpush1.msra.mxu0 %v248
    %323 = vmatprep.subr.mxu0 %v253
    %324 = vmatpush1.msra.mxu0 %v252
    %325 = vmatprep.subr.mxu0 %v257
    %326 = vmatpush1.msra.mxu0 %v256
    %327 = vmatprep.subr.mxu0 %v261
    %328 = vmatpush1.msra.mxu0 %v260
    %329 = vmatprep.subr.mxu0 %v265
    %330 = vmatpush1.msra.mxu0 %v264
    %331 = vmatprep.subr.mxu0 0.0
    %332 = vmatpush1.msra.mxu0 0.0
    %333 = vmatprep.subr.mxu0 0.0
    %334 = vmatpush1.msra.mxu0 0.0
    %335 = vmatprep.subr.mxu0 0.0
    %336 = vmatpush1.msra.mxu0 0.0
    %337 = vmatprep.subr.mxu0 0.0
    %338 = vmatpush1.msra.mxu0 0.0
    %339 = vmatprep.subr.mxu0 0.0
    %340 = vmatpush1.msra.mxu0 0.0
    %341 = vmatprep.subr.mxu0 0.0
    %342 = vmatpush1.msra.mxu0 0.0
    %343 = vmatprep.subr.mxu0 0.0
    %344 = vmatpush1.msra.mxu0 0.0
    %345 = vmatprep.subr.mxu0 0.0
    %346 = vmatpush1.msra.mxu0 0.0
    %347 = vmatprep.subr.mxu0 0.0
    %348 = vmatpush1.msra.mxu0 0.0
    %349 = vmatprep.subr.mxu0 0.0
    %350 = vmatpush1.msra.mxu0 0.0
    %351 = vmatprep.subr.mxu0 0.0
    %352 = vmatpush1.msra.mxu0 0.0
    %353 = vmatprep.subr.mxu0 0.0
    %354 = vmatpush1.msra.mxu0 0.0
    %355 = vmatprep.subr.mxu0 0.0
    %356 = vmatpush1.msra.mxu0 0.0
    %357 = vmatprep.subr.mxu0 0.0
    %358 = vmatpush1.msra.mxu0 0.0
    %359 = vmatprep.subr.mxu0 0.0
    %360 = vmatpush1.msra.mxu0 0.0
    %361 = vmatprep.subr.mxu0 0.0
    %362 = vmatpush1.msra.mxu0 0.0
    %363 = vmatprep.subr.mxu0 0.0
    %364 = vmatpush1.msra.mxu0 0.0
    %365 = vmatprep.subr.mxu0 0.0
    %366 = vmatpush1.msra.mxu0 0.0
    %367 = vmatprep.subr.mxu0 0.0
    %368 = vmatpush1.msra.mxu0 0.0
    %369 = vmatprep.subr.mxu0 0.0
    %370 = vmatpush1.msra.mxu0 0.0
    %371 = vmatprep.subr.mxu0 0.0
    %372 = vmatpush1.msra.mxu0 0.0
    %373 = vmatprep.subr.mxu0 0.0
    %374 = vmatpush1.msra.mxu0 0.0
    %375 = vmatprep.subr.mxu0 0.0
    %376 = vmatpush1.msra.mxu0 0.0
    %377 = vmatprep.subr.mxu0 0.0
    %378 = vmatpush1.msra.mxu0 0.0
    %379 = vmatprep.mubr.f32.mxu0 0.0
    %380 = vmatmul.mubr.f32.gmra.mrb[0].mxu0 %v292
    %v381 = vpop.f32.mrb[0].mxu0
    %v382 = vadd.f32 %v273, %v381
    %v383 = vpop.f32.mrb[0].mxu0
    %v384 = vadd.f32 %v277, %v383
    %385 = vmatprep.mubr.f32.mxu0 0.0
    %386 = vmatmul.mubr.f32.gmra.mrb[0].mxu0 %v295
    %v387 = vpop.f32.mrb[0].mxu0
    %v388 = vadd.f32 %v273, %v387
    %v389 = vpop.f32.mrb[0].mxu0
    %v390 = vadd.f32 %v277, %v389
    %391 = vmatprep.mubr.f32.mxu0 0.0
    %392 = vmatmul.mubr.f32.gmra.mrb[0].mxu0 %v298
    %v393 = vpop.f32.mrb[0].mxu0
    %v394 = vadd.f32 %v273, %v393
    %v395 = vpop.f32.mrb[0].mxu0
    %v396 = vadd.f32 %v277, %v395
    %397 = vmatprep.mubr.f32.mxu0 0.0
    %398 = vmatmul.mubr.f32.gmra.mrb[0].mxu0 %v301
    %v399 = vpop.f32.mrb[0].mxu0
    %v400 = vadd.f32 %v273, %v399
    %v401 = vpop.f32.mrb[0].mxu0
    %v402 = vadd.f32 %v277, %v401
    %403 = vmatprep.mubr.f32.mxu0 0.0
    %404 = vmatmul.mubr.f32.gmra.mrb[0].mxu0 %v304
    %v405 = vpop.f32.mrb[0].mxu0
    %v406 = vadd.f32 %v273, %v405
    %v407 = vpop.f32.mrb[0].mxu0
    %v408 = vadd.f32 %v277, %v407
    %409 = vmatprep.mubr.f32.mxu0 0.0
    %410 = vmatmul.mubr.f32.gmra.mrb[0].mxu0 %v307
    %v411 = vpop.f32.mrb[0].mxu0
    %v412 = vadd.f32 %v273, %v411
    %v413 = vpop.f32.mrb[0].mxu0
    %v414 = vadd.f32 %v277, %v413
    %415 = vmatprep.mubr.f32.mxu0 0.0
    %416 = vmatmul.mubr.f32.gmra.mrb[0].mxu0 %v310
    %v417 = vpop.f32.mrb[0].mxu0
    %v418 = vadd.f32 %v273, %v417
    %v419 = vpop.f32.mrb[0].mxu0
    %v420 = vadd.f32 %v277, %v419
    %421 = vmatprep.mubr.f32.mxu0 0.0
    %422 = vmatmul.mubr.f32.gmra.mrb[0].mxu0 %v313
    %v423 = vpop.f32.mrb[0].mxu0
    %v424 = vadd.f32 %v273, %v423
    %v425 = vpop.f32.mrb[0].mxu0
    %v426 = vadd.f32 %v277, %v425
    %427 = vdwg.mxu0
    %428 = vmatprep.subr.mxu0 %v239
    %429 = vmatpush1.msra.mxu0 %v238
    %430 = vmatprep.subr.mxu0 %v243
    %431 = vmatpush1.msra.mxu0 %v242
    %432 = vmatprep.subr.mxu0 %v247
    %433 = vmatpush1.msra.mxu0 %v246
    %434 = vmatprep.subr.mxu0 %v251
    %435 = vmatpush1.msra.mxu0 %v250
    %436 = vmatprep.subr.mxu0 %v255
    %437 = vmatpush1.msra.mxu0 %v254
    %438 = vmatprep.subr.mxu0 %v259
    %439 = vmatpush1.msra.mxu0 %v258
    %440 = vmatprep.subr.mxu0 %v263
    %441 = vmatpush1.msra.mxu0 %v262
    %442 = vmatprep.subr.mxu0 %v267
    %443 = vmatpush1.msra.mxu0 %v266
    %444 = vmatprep.subr.mxu0 0.0
    %445 = vmatpush1.msra.mxu0 0.0
    %446 = vmatprep.subr.mxu0 0.0
    %447 = vmatpush1.msra.mxu0 0.0
    %448 = vmatprep.subr.mxu0 0.0
    %449 = vmatpush1.msra.mxu0 0.0
    %450 = vmatprep.subr.mxu0 0.0
    %451 = vmatpush1.msra.mxu0 0.0
    %452 = vmatprep.subr.mxu0 0.0
    %453 = vmatpush1.msra.mxu0 0.0
    %454 = vmatprep.subr.mxu0 0.0
    %455 = vmatpush1.msra.mxu0 0.0
    %456 = vmatprep.subr.mxu0 0.0
    %457 = vmatpush1.msra.mxu0 0.0
    %458 = vmatprep.subr.mxu0 0.0
    %459 = vmatpush1.msra.mxu0 0.0
    %460 = vmatprep.subr.mxu0 0.0
    %461 = vmatpush1.msra.mxu0 0.0
    %462 = vmatprep.subr.mxu0 0.0
    %463 = vmatpush1.msra.mxu0 0.0
    %464 = vmatprep.subr.mxu0 0.0
    %465 = vmatpush1.msra.mxu0 0.0
    %466 = vmatprep.subr.mxu0 0.0
    %467 = vmatpush1.msra.mxu0 0.0
    %468 = vmatprep.subr.mxu0 0.0
    %469 = vmatpush1.msra.mxu0 0.0
    %470 = vmatprep.subr.mxu0 0.0
    %471 = vmatpush1.msra.mxu0 0.0
    %472 = vmatprep.subr.mxu0 0.0
    %473 = vmatpush1.msra.mxu0 0.0
    %474 = vmatprep.subr.mxu0 0.0
    %475 = vmatpush1.msra.mxu0 0.0
    %476 = vmatprep.subr.mxu0 0.0
    %477 = vmatpush1.msra.mxu0 0.0
    %478 = vmatprep.subr.mxu0 0.0
    %479 = vmatpush1.msra.mxu0 0.0
    %480 = vmatprep.subr.mxu0 0.0
    %481 = vmatpush1.msra.mxu0 0.0
    %482 = vmatprep.subr.mxu0 0.0
    %483 = vmatpush1.msra.mxu0 0.0
    %484 = vmatprep.subr.mxu0 0.0
    %485 = vmatpush1.msra.mxu0 0.0
    %486 = vmatprep.subr.mxu0 0.0
    %487 = vmatpush1.msra.mxu0 0.0
    %488 = vmatprep.subr.mxu0 0.0
    %489 = vmatpush1.msra.mxu0 0.0
    %490 = vmatprep.subr.mxu0 0.0
    %491 = vmatpush1.msra.mxu0 0.0
    %492 = vmatprep.mubr.f32.mxu0 0.0
    %493 = vmatmul.mubr.f32.gmra.mrb[0].mxu0 %v292
    %v494 = vpop.f32.mrb[0].mxu0
    %v495 = vadd.f32 %v281, %v494
    %v496 = vpop.f32.mrb[0].mxu0
    %v497 = vadd.f32 %v285, %v496
    %498 = vmatprep.mubr.f32.mxu0 0.0
    %499 = vmatmul.mubr.f32.gmra.mrb[0].mxu0 %v295
    %v500 = vpop.f32.mrb[0].mxu0
    %v501 = vadd.f32 %v281, %v500
    %v502 = vpop.f32.mrb[0].mxu0
    %v503 = vadd.f32 %v285, %v502
    %504 = vmatprep.mubr.f32.mxu0 0.0
    %505 = vmatmul.mubr.f32.gmra.mrb[0].mxu0 %v298
    %v506 = vpop.f32.mrb[0].mxu0
    %v507 = vadd.f32 %v281, %v506
    %v508 = vpop.f32.mrb[0].mxu0
    %v509 = vadd.f32 %v285, %v508
    %510 = vmatprep.mubr.f32.mxu0 0.0
    %511 = vmatmul.mubr.f32.gmra.mrb[0].mxu0 %v301
    %v512 = vpop.f32.mrb[0].mxu0
    %v513 = vadd.f32 %v281, %v512
    %v514 = vpop.f32.mrb[0].mxu0
    %v515 = vadd.f32 %v285, %v514
    %516 = vmatprep.mubr.f32.mxu0 0.0
    %517 = vmatmul.mubr.f32.gmra.mrb[0].mxu0 %v304
    %v518 = vpop.f32.mrb[0].mxu0
    %v519 = vadd.f32 %v281, %v518
    %v520 = vpop.f32.mrb[0].mxu0
    %v521 = vadd.f32 %v285, %v520
    %522 = vmatprep.mubr.f32.mxu0 0.0
    %523 = vmatmul.mubr.f32.gmra.mrb[0].mxu0 %v307
    %v524 = vpop.f32.mrb[0].mxu0
    %v525 = vadd.f32 %v281, %v524
    %v526 = vpop.f32.mrb[0].mxu0
    %v527 = vadd.f32 %v285, %v526
    %528 = vmatprep.mubr.f32.mxu0 0.0
    %529 = vmatmul.mubr.f32.gmra.mrb[0].mxu0 %v310
    %v530 = vpop.f32.mrb[0].mxu0
    %v531 = vadd.f32 %v281, %v530
    %v532 = vpop.f32.mrb[0].mxu0
    %v533 = vadd.f32 %v285, %v532
    %534 = vmatprep.mubr.f32.mxu0 0.0
    %535 = vmatmul.mubr.f32.gmra.mrb[0].mxu0 %v313
    %v536 = vpop.f32.mrb[0].mxu0
    %v537 = vadd.f32 %v281, %v536
    %v538 = vpop.f32.mrb[0].mxu0
    %v539 = vadd.f32 %v285, %v538
    %540 = vdwg.mxu0
    %541 = vst [vmem:[#allocation2] sm:$0xff] %v382
    %542 = vst [vmem:[#allocation2 + $0x8] sm:$0xff] %v384
    %543 = vst [vmem:[#allocation2 + $0x10] sm:$0xff] %v495
    %544 = vst [vmem:[#allocation2 + $0x18] sm:$0xff] %v497
    %545 = vst [vmem:[#allocation2 + $0x20] sm:$0xff] %v388
    %546 = vst [vmem:[#allocation2 + $0x28] sm:$0xff] %v390
    %547 = vst [vmem:[#allocation2 + $0x30] sm:$0xff] %v501
    %548 = vst [vmem:[#allocation2 + $0x38] sm:$0xff] %v503
    %549 = vst [vmem:[#allocation2 + $0x40] sm:$0xff] %v394
    %550 = vst [vmem:[#allocation2 + $0x48] sm:$0xff] %v396
    %551 = vst [vmem:[#allocation2 + $0x50] sm:$0xff] %v507
    %552 = vst [vmem:[#allocation2 + $0x58] sm:$0xff] %v509
    %553 = vst [vmem:[#allocation2 + $0x60] sm:$0xff] %v400
    %554 = vst [vmem:[#allocation2 + $0x68] sm:$0xff] %v402
    %555 = vst [vmem:[#allocation2 + $0x70] sm:$0xff] %v513
    %556 = vst [vmem:[#allocation2 + $0x78] sm:$0xff] %v515
    %557 = vst [vmem:[#allocation2 + $0x80] sm:$0xff] %v406
    %558 = vst [vmem:[#allocation2 + $0x88] sm:$0xff] %v408
    %559 = vst [vmem:[#allocation2 + $0x90] sm:$0xff] %v519
    %560 = vst [vmem:[#allocation2 + $0x98] sm:$0xff] %v521
    %561 = vst [vmem:[#allocation2 + $0xa0] sm:$0xff] %v412
    %562 = vst [vmem:[#allocation2 + $0xa8] sm:$0xff] %v414
    %563 = vst [vmem:[#allocation2 + $0xb0] sm:$0xff] %v525
    %564 = vst [vmem:[#allocation2 + $0xb8] sm:$0xff] %v527
    %565 = vst [vmem:[#allocation2 + $0xc0] sm:$0xff] %v418
    %566 = vst [vmem:[#allocation2 + $0xc8] sm:$0xff] %v420
    %567 = vst [vmem:[#allocation2 + $0xd0] sm:$0xff] %v531
    %568 = vst [vmem:[#allocation2 + $0xd8] sm:$0xff] %v533
    %569 = vst [vmem:[#allocation2 + $0xe0] sm:$0xff] %v424
    %570 = vst [vmem:[#allocation2 + $0xe8] sm:$0xff] %v426
    %571 = vst [vmem:[#allocation2 + $0xf0] sm:$0xff] %v537
    %572 = vst [vmem:[#allocation2 + $0xf8] sm:$0xff] %v539
    %v573 = vld [vmem:[#allocation2] sm:$0xff]
    %v574 = vld [vmem:[#allocation2 + $0x8] sm:$0xff]
    %v575 = vld [vmem:[#allocation2 + $0x10] sm:$0xff]
    %v576 = vld [vmem:[#allocation2 + $0x18] sm:$0xff]
    %v577 = vld [vmem:[%s5] sm:$0xff]
    %v578 = vld [vmem:[%s5 + $0x8] sm:$0xff]
    %v579 = vld [vmem:[%s5 + $0x10] sm:$0xff]
    %v580 = vld [vmem:[%s5 + $0x18] sm:$0xff]
    %v581 = vld [vmem:[%s5 + $0x20] sm:$0xff]
    %v582 = vld [vmem:[%s5 + $0x28] sm:$0xff]
    %v583 = vld [vmem:[%s5 + $0x30] sm:$0xff]
    %v584 = vld [vmem:[%s5 + $0x38] sm:$0xff]
    %v585 = vld [vmem:[%s5 + $0x40] sm:$0xff]
    %v586 = vld [vmem:[%s5 + $0x48] sm:$0xff]
    %v587 = vld [vmem:[%s5 + $0x50] sm:$0xff]
    %v588 = vld [vmem:[%s5 + $0x58] sm:$0xff]
    %v589 = vld [vmem:[%s5 + $0x60] sm:$0xff]
    %v590 = vld [vmem:[%s5 + $0x68] sm:$0xff]
    %v591 = vld [vmem:[%s5 + $0x70] sm:$0xff]
    %v592 = vld [vmem:[%s5 + $0x78] sm:$0xff]
    %v593 = vld [vmem:[%s5 + $0x80] sm:$0xff]
    %v594 = vld [vmem:[%s5 + $0x88] sm:$0xff]
    %v595 = vld [vmem:[%s5 + $0x90] sm:$0xff]
    %v596 = vld [vmem:[%s5 + $0x98] sm:$0xff]
    %v597 = vld [vmem:[%s5 + $0xa0] sm:$0xff]
    %v598 = vld [vmem:[%s5 + $0xa8] sm:$0xff]
    %v599 = vld [vmem:[%s5 + $0xb0] sm:$0xff]
    %v600 = vld [vmem:[%s5 + $0xb8] sm:$0xff]
    %v601 = vld [vmem:[%s5 + $0xc0] sm:$0xff]
    %v602 = vld [vmem:[%s5 + $0xc8] sm:$0xff]
    %v603 = vld [vmem:[%s5 + $0xd0] sm:$0xff]
    %v604 = vld [vmem:[%s5 + $0xd8] sm:$0xff]
    %v605 = vld [vmem:[%s5 + $0xe0] sm:$0xff]
    %v606 = vld [vmem:[%s5 + $0xe8] sm:$0xff]
    %v607 = vld [vmem:[%s5 + $0xf0] sm:$0xff]
    %v608 = vld [vmem:[%s5 + $0xf8] sm:$0xff]
    %v609 = vld [vmem:[%s5 + $0x100] sm:$0xff]
    %v610 = vld [vmem:[%s5 + $0x108] sm:$0xff]
    %v611 = vld [vmem:[%s5 + $0x110] sm:$0xff]
    %v612 = vld [vmem:[%s5 + $0x118] sm:$0xff]
    %v613 = vld [vmem:[%s5 + $0x120] sm:$0xff]
    %v614 = vld [vmem:[%s5 + $0x128] sm:$0xff]
    %v615 = vld [vmem:[%s5 + $0x130] sm:$0xff]
    %v616 = vld [vmem:[%s5 + $0x138] sm:$0xff]
    %v617 = vld [vmem:[%s5 + $0x140] sm:$0xff]
    %v618 = vld [vmem:[%s5 + $0x148] sm:$0xff]
    %v619 = vld [vmem:[%s5 + $0x150] sm:$0xff]
    %v620 = vld [vmem:[%s5 + $0x158] sm:$0xff]
    %v621 = vld [vmem:[%s5 + $0x160] sm:$0xff]
    %v622 = vld [vmem:[%s5 + $0x168] sm:$0xff]
    %v623 = vld [vmem:[%s5 + $0x170] sm:$0xff]
    %v624 = vld [vmem:[%s5 + $0x178] sm:$0xff]
    %v625 = vld [vmem:[%s5 + $0x180] sm:$0xff]
    %v626 = vld [vmem:[%s5 + $0x188] sm:$0xff]
    %v627 = vld [vmem:[%s5 + $0x190] sm:$0xff]
    %v628 = vld [vmem:[%s5 + $0x198] sm:$0xff]
    %v629 = vld [vmem:[%s5 + $0x1a0] sm:$0xff]
    %v630 = vld [vmem:[%s5 + $0x1a8] sm:$0xff]
    %v631 = vld [vmem:[%s5 + $0x1b0] sm:$0xff]
    %v632 = vld [vmem:[%s5 + $0x1b8] sm:$0xff]
    %v633 = vld [vmem:[%s5 + $0x1c0] sm:$0xff]
    %v634 = vld [vmem:[%s5 + $0x1c8] sm:$0xff]
    %v635 = vld [vmem:[%s5 + $0x1d0] sm:$0xff]
    %v636 = vld [vmem:[%s5 + $0x1d8] sm:$0xff]
    %v637 = vld [vmem:[%s5 + $0x1e0] sm:$0xff]
    %v638 = vld [vmem:[%s5 + $0x1e8] sm:$0xff]
    %v639 = vld [vmem:[%s5 + $0x1f0] sm:$0xff]
    %v640 = vld [vmem:[%s5 + $0x1f8] sm:$0xff]
    %641 = vmatprep.subr.mxu0 %v578
    %642 = vmatpush1.msra.mxu0 %v577
    %643 = vmatprep.subr.mxu0 %v582
    %644 = vmatpush1.msra.mxu0 %v581
    %645 = vmatprep.subr.mxu0 %v586
    %646 = vmatpush1.msra.mxu0 %v585
    %647 = vmatprep.subr.mxu0 %v590
    %648 = vmatpush1.msra.mxu0 %v589
    %649 = vmatprep.subr.mxu0 %v594
    %650 = vmatpush1.msra.mxu0 %v593
    %651 = vmatprep.subr.mxu0 %v598
    %652 = vmatpush1.msra.mxu0 %v597
    %653 = vmatprep.subr.mxu0 %v602
    %654 = vmatpush1.msra.mxu0 %v601
    %655 = vmatprep.subr.mxu0 %v606
    %656 = vmatpush1.msra.mxu0 %v605
    %657 = vmatprep.subr.mxu0 %v610
    %658 = vmatpush1.msra.mxu0 %v609
    %659 = vmatprep.subr.mxu0 %v614
    %660 = vmatpush1.msra.mxu0 %v613
    %661 = vmatprep.subr.mxu0 %v618
    %662 = vmatpush1.msra.mxu0 %v617
    %663 = vmatprep.subr.mxu0 %v622
    %664 = vmatpush1.msra.mxu0 %v621
    %665 = vmatprep.subr.mxu0 %v626
    %666 = vmatpush1.msra.mxu0 %v625
    %667 = vmatprep.subr.mxu0 %v630
    %668 = vmatpush1.msra.mxu0 %v629
    %669 = vmatprep.subr.mxu0 %v634
    %670 = vmatpush1.msra.mxu0 %v633
    %671 = vmatprep.subr.mxu0 %v638
    %672 = vmatpush1.msra.mxu0 %v637
    %673 = vmatprep.subr.mxu0 0.0
    %674 = vmatpush1.msra.mxu0 0.0
    %675 = vmatprep.subr.mxu0 0.0
    %676 = vmatpush1.msra.mxu0 0.0
    %677 = vmatprep.subr.mxu0 0.0
    %678 = vmatpush1.msra.mxu0 0.0
    %679 = vmatprep.subr.mxu0 0.0
    %680 = vmatpush1.msra.mxu0 0.0
    %681 = vmatprep.subr.mxu0 0.0
    %682 = vmatpush1.msra.mxu0 0.0
    %683 = vmatprep.subr.mxu0 0.0
    %684 = vmatpush1.msra.mxu0 0.0
    %685 = vmatprep.subr.mxu0 0.0
    %686 = vmatpush1.msra.mxu0 0.0
    %687 = vmatprep.subr.mxu0 0.0
    %688 = vmatpush1.msra.mxu0 0.0
    %689 = vmatprep.subr.mxu0 0.0
    %690 = vmatpush1.msra.mxu0 0.0
    %691 = vmatprep.subr.mxu0 0.0
    %692 = vmatpush1.msra.mxu0 0.0
    %693 = vmatprep.subr.mxu0 0.0
    %694 = vmatpush1.msra.mxu0 0.0
    %695 = vmatprep.subr.mxu0 0.0
    %696 = vmatpush1.msra.mxu0 0.0
    %697 = vmatprep.subr.mxu0 0.0
    %698 = vmatpush1.msra.mxu0 0.0
    %699 = vmatprep.subr.mxu0 0.0
    %700 = vmatpush1.msra.mxu0 0.0
    %701 = vmatprep.subr.mxu0 0.0
    %702 = vmatpush1.msra.mxu0 0.0
    %703 = vmatprep.subr.mxu0 0.0
    %704 = vmatpush1.msra.mxu0 0.0
    %705 = vmatprep.mubr.f32.mxu0 0.0
    %706 = vmatmul.mubr.f32.gmra.mrb[0].mxu0 0.0
    %v707 = vpop.f32.mrb[0].mxu0
    %v708 = vadd.f32 0.0, %v707
    %v709 = vpop.f32.mrb[0].mxu0
    %v710 = vadd.f32 0.0, %v709
    %711 = vdwg.mxu0
    %712 = vmatprep.subr.mxu0 %v580
    %713 = vmatpush1.msra.mxu0 %v579
    %714 = vmatprep.subr.mxu0 %v584
    %715 = vmatpush1.msra.mxu0 %v583
    %716 = vmatprep.subr.mxu0 %v588
    %717 = vmatpush1.msra.mxu0 %v587
    %718 = vmatprep.subr.mxu0 %v592
    %719 = vmatpush1.msra.mxu0 %v591
    %720 = vmatprep.subr.mxu0 %v596
    %721 = vmatpush1.msra.mxu0 %v595
    %722 = vmatprep.subr.mxu0 %v600
    %723 = vmatpush1.msra.mxu0 %v599
    %724 = vmatprep.subr.mxu0 %v604
    %725 = vmatpush1.msra.mxu0 %v603
    %726 = vmatprep.subr.mxu0 %v608
    %727 = vmatpush1.msra.mxu0 %v607
    %728 = vmatprep.subr.mxu0 %v612
    %729 = vmatpush1.msra.mxu0 %v611
    %730 = vmatprep.subr.mxu0 %v616
    %731 = vmatpush1.msra.mxu0 %v615
    %732 = vmatprep.subr.mxu0 %v620
    %733 = vmatpush1.msra.mxu0 %v619
    %734 = vmatprep.subr.mxu0 %v624
    %735 = vmatpush1.msra.mxu0 %v623
    %736 = vmatprep.subr.mxu0 %v628
    %737 = vmatpush1.msra.mxu0 %v627
    %738 = vmatprep.subr.mxu0 %v632
    %739 = vmatpush1.msra.mxu0 %v631
    %740 = vmatprep.subr.mxu0 %v636
    %741 = vmatpush1.msra.mxu0 %v635
    %742 = vmatprep.subr.mxu0 %v640
    %743 = vmatpush1.msra.mxu0 %v639
    %744 = vmatprep.subr.mxu0 0.0
    %745 = vmatpush1.msra.mxu0 0.0
    %746 = vmatprep.subr.mxu0 0.0
    %747 = vmatpush1.msra.mxu0 0.0
    %748 = vmatprep.subr.mxu0 0.0
    %749 = vmatpush1.msra.mxu0 0.0
    %750 = vmatprep.subr.mxu0 0.0
    %751 = vmatpush1.msra.mxu0 0.0
    %752 = vmatprep.subr.mxu0 0.0
    %753 = vmatpush1.msra.mxu0 0.0
    %754 = vmatprep.subr.mxu0 0.0
    %755 = vmatpush1.msra.mxu0 0.0
    %756 = vmatprep.subr.mxu0 0.0
    %757 = vmatpush1.msra.mxu0 0.0
    %758 = vmatprep.subr.mxu0 0.0
    %759 = vmatpush1.msra.mxu0 0.0
    %760 = vmatprep.subr.mxu0 0.0
    %761 = vmatpush1.msra.mxu0 0.0
    %762 = vmatprep.subr.mxu0 0.0
    %763 = vmatpush1.msra.mxu0 0.0
    %764 = vmatprep.subr.mxu0 0.0
    %765 = vmatpush1.msra.mxu0 0.0
    %766 = vmatprep.subr.mxu0 0.0
    %767 = vmatpush1.msra.mxu0 0.0
    %768 = vmatprep.subr.mxu0 0.0
    %769 = vmatpush1.msra.mxu0 0.0
    %770 = vmatprep.subr.mxu0 0.0
    %771 = vmatpush1.msra.mxu0 0.0
    %772 = vmatprep.subr.mxu0 0.0
    %773 = vmatpush1.msra.mxu0 0.0
    %774 = vmatprep.subr.mxu0 0.0
    %775 = vmatpush1.msra.mxu0 0.0
    %776 = vmatprep.mubr.f32.mxu0 0.0
    %777 = vmatmul.mubr.f32.gmra.mrb[0].mxu0 0.0
    %v778 = vpop.f32.mrb[0].mxu0
    %v779 = vadd.f32 0.0, %v778
    %v780 = vpop.f32.mrb[0].mxu0
    %v781 = vadd.f32 0.0, %v780
    %782 = vdwg.mxu0
    %v783 = vadd.f32 %v573, %v708
    %v784 = vadd.f32 %v574, %v710
    %v785 = vadd.f32 %v575, %v779
    %v786 = vadd.f32 %v576, %v781
    %v787 = vxor.u32 %v783, 2147483648
    %v788 = vmul.f32 %v787, 1.442695
    %v789 = vpow.pop %v788
    %v790 = vadd.f32 %v789, 1.0
    %v791 = vrcp.pop %v790
    %v792 = vmul.f32 1.0, %v791
    %v793 = vxor.u32 %v784, 2147483648
    %v794 = vmul.f32 %v793, 1.442695
    %v795 = vpow.pop %v794
    %v796 = vadd.f32 %v795, 1.0
    %v797 = vrcp.pop %v796
    %v798 = vmul.f32 1.0, %v797
    %v799 = vtanh.pop %v785
    %v800 = vxor.u32 %v786, 2147483648
    %v801 = vmul.f32 %v800, 1.442695
    %v802 = vpow.pop %v801
    %v803 = vadd.f32 %v802, 1.0
    %v804 = vrcp.pop %v803
    %v805 = vmul.f32 1.0, %v804
    %v806 = vmul.f32 %v798, 0.0
    %v807 = vmul.f32 %v792, %v799
    %v808 = vadd.f32 %v806, %v807
    %v809 = vtanh.pop %v808
    %v810 = vmul.f32 %v805, %v809
    %v811 = vsel %vm84, 1, 0
    %812 = vset.pattern.permute.xlu0 0
    %813 = vperm.xlu0 %812, %v811
    %v814 = vpop.permute.xlu0 %813
    %vm815 = vcmp.eq.s32.totalorder %v814, 1
    %v816 = vsel %vm815, %v810, 0.0
    %v817 = vsel %vm815, %v808, 0.0
    %v818 = vld [vmem:[#allocation2 + $0x20] sm:$0xff]
    %v819 = vld [vmem:[#allocation2 + $0x28] sm:$0xff]
    %v820 = vld [vmem:[#allocation2 + $0x30] sm:$0xff]
    %v821 = vld [vmem:[#allocation2 + $0x38] sm:$0xff]
    %822 = vmatprep.subr.mxu0 %v578
    %823 = vmatpush1.msra.mxu0 %v577
    %824 = vmatprep.subr.mxu0 %v582
    %825 = vmatpush1.msra.mxu0 %v581
    %826 = vmatprep.subr.mxu0 %v586
    %827 = vmatpush1.msra.mxu0 %v585
    %828 = vmatprep.subr.mxu0 %v590
    %829 = vmatpush1.msra.mxu0 %v589
    %830 = vmatprep.subr.mxu0 %v594
    %831 = vmatpush1.msra.mxu0 %v593
    %832 = vmatprep.subr.mxu0 %v598
    %833 = vmatpush1.msra.mxu0 %v597
    %834 = vmatprep.subr.mxu0 %v602
    %835 = vmatpush1.msra.mxu0 %v601
    %836 = vmatprep.subr.mxu0 %v606
    %837 = vmatpush1.msra.mxu0 %v605
    %838 = vmatprep.subr.mxu0 %v610
    %839 = vmatpush1.msra.mxu0 %v609
    %840 = vmatprep.subr.mxu0 %v614
    %841 = vmatpush1.msra.mxu0 %v613
    %842 = vmatprep.subr.mxu0 %v618
    %843 = vmatpush1.msra.mxu0 %v617
    %844 = vmatprep.subr.mxu0 %v622
    %845 = vmatpush1.msra.mxu0 %v621
    %846 = vmatprep.subr.mxu0 %v626
    %847 = vmatpush1.msra.mxu0 %v625
    %848 = vmatprep.subr.mxu0 %v630
    %849 = vmatpush1.msra.mxu0 %v629
    %850 = vmatprep.subr.mxu0 %v634
    %851 = vmatpush1.msra.mxu0 %v633
    %852 = vmatprep.subr.mxu0 %v638
    %853 = vmatpush1.msra.mxu0 %v637
    %854 = vmatprep.subr.mxu0 0.0
    %855 = vmatpush1.msra.mxu0 0.0
    %856 = vmatprep.subr.mxu0 0.0
    %857 = vmatpush1.msra.mxu0 0.0
    %858 = vmatprep.subr.mxu0 0.0
    %859 = vmatpush1.msra.mxu0 0.0
    %860 = vmatprep.subr.mxu0 0.0
    %861 = vmatpush1.msra.mxu0 0.0
    %862 = vmatprep.subr.mxu0 0.0
    %863 = vmatpush1.msra.mxu0 0.0
    %864 = vmatprep.subr.mxu0 0.0
    %865 = vmatpush1.msra.mxu0 0.0
    %866 = vmatprep.subr.mxu0 0.0
    %867 = vmatpush1.msra.mxu0 0.0
    %868 = vmatprep.subr.mxu0 0.0
    %869 = vmatpush1.msra.mxu0 0.0
    %870 = vmatprep.subr.mxu0 0.0
    %871 = vmatpush1.msra.mxu0 0.0
    %872 = vmatprep.subr.mxu0 0.0
    %873 = vmatpush1.msra.mxu0 0.0
    %874 = vmatprep.subr.mxu0 0.0
    %875 = vmatpush1.msra.mxu0 0.0
    %876 = vmatprep.subr.mxu0 0.0
    %877 = vmatpush1.msra.mxu0 0.0
    %878 = vmatprep.subr.mxu0 0.0
    %879 = vmatpush1.msra.mxu0 0.0
    %880 = vmatprep.subr.mxu0 0.0
    %881 = vmatpush1.msra.mxu0 0.0
    %882 = vmatprep.subr.mxu0 0.0
    %883 = vmatpush1.msra.mxu0 0.0
    %884 = vmatprep.subr.mxu0 0.0
    %885 = vmatpush1.msra.mxu0 0.0
    %886 = vmatprep.mubr.f32.mxu0 0.0
    %887 = vmatmul.mubr.f32.gmra.mrb[0].mxu0 %v816
    %v888 = vpop.f32.mrb[0].mxu0
    %v889 = vadd.f32 0.0, %v888
    %v890 = vpop.f32.mrb[0].mxu0
    %v891 = vadd.f32 0.0, %v890
    %892 = vdwg.mxu0
    %893 = vmatprep.subr.mxu0 %v580
    %894 = vmatpush1.msra.mxu0 %v579
    %895 = vmatprep.subr.mxu0 %v584
    %896 = vmatpush1.msra.mxu0 %v583
    %897 = vmatprep.subr.mxu0 %v588
    %898 = vmatpush1.msra.mxu0 %v587
    %899 = vmatprep.subr.mxu0 %v592
    %900 = vmatpush1.msra.mxu0 %v591
    %901 = vmatprep.subr.mxu0 %v596
    %902 = vmatpush1.msra.mxu0 %v595
    %903 = vmatprep.subr.mxu0 %v600
    %904 = vmatpush1.msra.mxu0 %v599
    %905 = vmatprep.subr.mxu0 %v604
    %906 = vmatpush1.msra.mxu0 %v603
    %907 = vmatprep.subr.mxu0 %v608
    %908 = vmatpush1.msra.mxu0 %v607
    %909 = vmatprep.subr.mxu0 %v612
    %910 = vmatpush1.msra.mxu0 %v611
    %911 = vmatprep.subr.mxu0 %v616
    %912 = vmatpush1.msra.mxu0 %v615
    %913 = vmatprep.subr.mxu0 %v620
    %914 = vmatpush1.msra.mxu0 %v619
    %915 = vmatprep.subr.mxu0 %v624
    %916 = vmatpush1.msra.mxu0 %v623
    %917 = vmatprep.subr.mxu0 %v628
    %918 = vmatpush1.msra.mxu0 %v627
    %919 = vmatprep.subr.mxu0 %v632
    %920 = vmatpush1.msra.mxu0 %v631
    %921 = vmatprep.subr.mxu0 %v636
    %922 = vmatpush1.msra.mxu0 %v635
    %923 = vmatprep.subr.mxu0 %v640
    %924 = vmatpush1.msra.mxu0 %v639
    %925 = vmatprep.subr.mxu0 0.0
    %926 = vmatpush1.msra.mxu0 0.0
    %927 = vmatprep.subr.mxu0 0.0
    %928 = vmatpush1.msra.mxu0 0.0
    %929 = vmatprep.subr.mxu0 0.0
    %930 = vmatpush1.msra.mxu0 0.0
    %931 = vmatprep.subr.mxu0 0.0
    %932 = vmatpush1.msra.mxu0 0.0
    %933 = vmatprep.subr.mxu0 0.0
    %934 = vmatpush1.msra.mxu0 0.0
    %935 = vmatprep.subr.mxu0 0.0
    %936 = vmatpush1.msra.mxu0 0.0
    %937 = vmatprep.subr.mxu0 0.0
    %938 = vmatpush1.msra.mxu0 0.0
    %939 = vmatprep.subr.mxu0 0.0
    %940 = vmatpush1.msra.mxu0 0.0
    %941 = vmatprep.subr.mxu0 0.0
    %942 = vmatpush1.msra.mxu0 0.0
    %943 = vmatprep.subr.mxu0 0.0
    %944 = vmatpush1.msra.mxu0 0.0
    %945 = vmatprep.subr.mxu0 0.0
    %946 = vmatpush1.msra.mxu0 0.0
    %947 = vmatprep.subr.mxu0 0.0
    %948 = vmatpush1.msra.mxu0 0.0
    %949 = vmatprep.subr.mxu0 0.0
    %950 = vmatpush1.msra.mxu0 0.0
    %951 = vmatprep.subr.mxu0 0.0
    %952 = vmatpush1.msra.mxu0 0.0
    %953 = vmatprep.subr.mxu0 0.0
    %954 = vmatpush1.msra.mxu0 0.0
    %955 = vmatprep.subr.mxu0 0.0
    %956 = vmatpush1.msra.mxu0 0.0
    %957 = vmatprep.mubr.f32.mxu0 0.0
    %958 = vmatmul.mubr.f32.gmra.mrb[0].mxu0 %v816
    %v959 = vpop.f32.mrb[0].mxu0
    %v960 = vadd.f32 0.0, %v959
    %v961 = vpop.f32.mrb[0].mxu0
    %v962 = vadd.f32 0.0, %v961
    %963 = vdwg.mxu0
    %v964 = vadd.f32 %v818, %v889
    %v965 = vadd.f32 %v819, %v891
    %v966 = vadd.f32 %v820, %v960
    %v967 = vadd.f32 %v821, %v962
    %v968 = vxor.u32 %v964, 2147483648
    %v969 = vmul.f32 %v968, 1.442695
    %v970 = vpow.pop %v969
    %v971 = vadd.f32 %v970, 1.0
    %v972 = vrcp.pop %v971
    %v973 = vmul.f32 1.0, %v972
    %v974 = vxor.u32 %v965, 2147483648
    %v975 = vmul.f32 %v974, 1.442695
    %v976 = vpow.pop %v975
    %v977 = vadd.f32 %v976, 1.0
    %v978 = vrcp.pop %v977
    %v979 = vmul.f32 1.0, %v978
    %v980 = vtanh.pop %v966
    %v981 = vxor.u32 %v967, 2147483648
    %v982 = vmul.f32 %v981, 1.442695
    %v983 = vpow.pop %v982
    %v984 = vadd.f32 %v983, 1.0
    %v985 = vrcp.pop %v984
    %v986 = vmul.f32 1.0, %v985
    %v987 = vmul.f32 %v979, %v817
    %v988 = vmul.f32 %v973, %v980
    %v989 = vadd.f32 %v987, %v988
    %v990 = vtanh.pop %v989
    %v991 = vmul.f32 %v986, %v990
    %v992 = vsel %vm85, 1, 0
    %993 = vset.pattern.permute.xlu0 0
    %994 = vperm.xlu0 %993, %v992
    %v995 = vpop.permute.xlu0 %994
    %vm996 = vcmp.eq.s32.totalorder %v995, 1
    %v997 = vsel %vm996, %v991, %v816
    %v998 = vsel %vm996, %v989, %v817
    %v999 = vld [vmem:[#allocation2 + $0x40] sm:$0xff]
    %v1000 = vld [vmem:[#allocation2 + $0x48] sm:$0xff]
    %v1001 = vld [vmem:[#allocation2 + $0x50] sm:$0xff]
    %v1002 = vld [vmem:[#allocation2 + $0x58] sm:$0xff]
    %1003 = vmatprep.subr.mxu0 %v578
    %1004 = vmatpush1.msra.mxu0 %v577
    %1005 = vmatprep.subr.mxu0 %v582
    %1006 = vmatpush1.msra.mxu0 %v581
    %1007 = vmatprep.subr.mxu0 %v586
    %1008 = vmatpush1.msra.mxu0 %v585
    %1009 = vmatprep.subr.mxu0 %v590
    %1010 = vmatpush1.msra.mxu0 %v589
    %1011 = vmatprep.subr.mxu0 %v594
    %1012 = vmatpush1.msra.mxu0 %v593
    %1013 = vmatprep.subr.mxu0 %v598
    %1014 = vmatpush1.msra.mxu0 %v597
    %1015 = vmatprep.subr.mxu0 %v602
    %1016 = vmatpush1.msra.mxu0 %v601
    %1017 = vmatprep.subr.mxu0 %v606
    %1018 = vmatpush1.msra.mxu0 %v605
    %1019 = vmatprep.subr.mxu0 %v610
    %1020 = vmatpush1.msra.mxu0 %v609
    %1021 = vmatprep.subr.mxu0 %v614
    %1022 = vmatpush1.msra.mxu0 %v613
    %1023 = vmatprep.subr.mxu0 %v618
    %1024 = vmatpush1.msra.mxu0 %v617
    %1025 = vmatprep.subr.mxu0 %v622
    %1026 = vmatpush1.msra.mxu0 %v621
    %1027 = vmatprep.subr.mxu0 %v626
    %1028 = vmatpush1.msra.mxu0 %v625
    %1029 = vmatprep.subr.mxu0 %v630
    %1030 = vmatpush1.msra.mxu0 %v629
    %1031 = vmatprep.subr.mxu0 %v634
    %1032 = vmatpush1.msra.mxu0 %v633
    %1033 = vmatprep.subr.mxu0 %v638
    %1034 = vmatpush1.msra.mxu0 %v637
    %1035 = vmatprep.subr.mxu0 0.0
    %1036 = vmatpush1.msra.mxu0 0.0
    %1037 = vmatprep.subr.mxu0 0.0
    %1038 = vmatpush1.msra.mxu0 0.0
    %1039 = vmatprep.subr.mxu0 0.0
    %1040 = vmatpush1.msra.mxu0 0.0
    %1041 = vmatprep.subr.mxu0 0.0
    %1042 = vmatpush1.msra.mxu0 0.0
    %1043 = vmatprep.subr.mxu0 0.0
    %1044 = vmatpush1.msra.mxu0 0.0
    %1045 = vmatprep.subr.mxu0 0.0
    %1046 = vmatpush1.msra.mxu0 0.0
    %1047 = vmatprep.subr.mxu0 0.0
    %1048 = vmatpush1.msra.mxu0 0.0
    %1049 = vmatprep.subr.mxu0 0.0
    %1050 = vmatpush1.msra.mxu0 0.0
    %1051 = vmatprep.subr.mxu0 0.0
    %1052 = vmatpush1.msra.mxu0 0.0
    %1053 = vmatprep.subr.mxu0 0.0
    %1054 = vmatpush1.msra.mxu0 0.0
    %1055 = vmatprep.subr.mxu0 0.0
    %1056 = vmatpush1.msra.mxu0 0.0
    %1057 = vmatprep.subr.mxu0 0.0
    %1058 = vmatpush1.msra.mxu0 0.0
    %1059 = vmatprep.subr.mxu0 0.0
    %1060 = vmatpush1.msra.mxu0 0.0
    %1061 = vmatprep.subr.mxu0 0.0
    %1062 = vmatpush1.msra.mxu0 0.0
    %1063 = vmatprep.subr.mxu0 0.0
    %1064 = vmatpush1.msra.mxu0 0.0
    %1065 = vmatprep.subr.mxu0 0.0
    %1066 = vmatpush1.msra.mxu0 0.0
    %1067 = vmatprep.mubr.f32.mxu0 0.0
    %1068 = vmatmul.mubr.f32.gmra.mrb[0].mxu0 %v997
    %v1069 = vpop.f32.mrb[0].mxu0
    %v1070 = vadd.f32 0.0, %v1069
    %v1071 = vpop.f32.mrb[0].mxu0
    %v1072 = vadd.f32 0.0, %v1071
    %1073 = vdwg.mxu0
    %1074 = vmatprep.subr.mxu0 %v580
    %1075 = vmatpush1.msra.mxu0 %v579
    %1076 = vmatprep.subr.mxu0 %v584
    %1077 = vmatpush1.msra.mxu0 %v583
    %1078 = vmatprep.subr.mxu0 %v588
    %1079 = vmatpush1.msra.mxu0 %v587
    %1080 = vmatprep.subr.mxu0 %v592
    %1081 = vmatpush1.msra.mxu0 %v591
    %1082 = vmatprep.subr.mxu0 %v596
    %1083 = vmatpush1.msra.mxu0 %v595
    %1084 = vmatprep.subr.mxu0 %v600
    %1085 = vmatpush1.msra.mxu0 %v599
    %1086 = vmatprep.subr.mxu0 %v604
    %1087 = vmatpush1.msra.mxu0 %v603
    %1088 = vmatprep.subr.mxu0 %v608
    %1089 = vmatpush1.msra.mxu0 %v607
    %1090 = vmatprep.subr.mxu0 %v612
    %1091 = vmatpush1.msra.mxu0 %v611
    %1092 = vmatprep.subr.mxu0 %v616
    %1093 = vmatpush1.msra.mxu0 %v615
    %1094 = vmatprep.subr.mxu0 %v620
    %1095 = vmatpush1.msra.mxu0 %v619
    %1096 = vmatprep.subr.mxu0 %v624
    %1097 = vmatpush1.msra.mxu0 %v623
    %1098 = vmatprep.subr.mxu0 %v628
    %1099 = vmatpush1.msra.mxu0 %v627
    %1100 = vmatprep.subr.mxu0 %v632
    %1101 = vmatpush1.msra.mxu0 %v631
    %1102 = vmatprep.subr.mxu0 %v636
    %1103 = vmatpush1.msra.mxu0 %v635
    %1104 = vmatprep.subr.mxu0 %v640
    %1105 = vmatpush1.msra.mxu0 %v639
    %1106 = vmatprep.subr.mxu0 0.0
    %1107 = vmatpush1.msra.mxu0 0.0
    %1108 = vmatprep.subr.mxu0 0.0
    %1109 = vmatpush1.msra.mxu0 0.0
    %1110 = vmatprep.subr.mxu0 0.0
    %1111 = vmatpush1.msra.mxu0 0.0
    %1112 = vmatprep.subr.mxu0 0.0
    %1113 = vmatpush1.msra.mxu0 0.0
    %1114 = vmatprep.subr.mxu0 0.0
    %1115 = vmatpush1.msra.mxu0 0.0
    %1116 = vmatprep.subr.mxu0 0.0
    %1117 = vmatpush1.msra.mxu0 0.0
    %1118 = vmatprep.subr.mxu0 0.0
    %1119 = vmatpush1.msra.mxu0 0.0
    %1120 = vmatprep.subr.mxu0 0.0
    %1121 = vmatpush1.msra.mxu0 0.0
    %1122 = vmatprep.subr.mxu0 0.0
    %1123 = vmatpush1.msra.mxu0 0.0
    %1124 = vmatprep.subr.mxu0 0.0
    %1125 = vmatpush1.msra.mxu0 0.0
    %1126 = vmatprep.subr.mxu0 0.0
    %1127 = vmatpush1.msra.mxu0 0.0
    %1128 = vmatprep.subr.mxu0 0.0
    %1129 = vmatpush1.msra.mxu0 0.0
    %1130 = vmatprep.subr.mxu0 0.0
    %1131 = vmatpush1.msra.mxu0 0.0
    %1132 = vmatprep.subr.mxu0 0.0
    %1133 = vmatpush1.msra.mxu0 0.0
    %1134 = vmatprep.subr.mxu0 0.0
    %1135 = vmatpush1.msra.mxu0 0.0
    %1136 = vmatprep.subr.mxu0 0.0
    %1137 = vmatpush1.msra.mxu0 0.0
    %1138 = vmatprep.mubr.f32.mxu0 0.0
    %1139 = vmatmul.mubr.f32.gmra.mrb[0].mxu0 %v997
    %v1140 = vpop.f32.mrb[0].mxu0
    %v1141 = vadd.f32 0.0, %v1140
    %v1142 = vpop.f32.mrb[0].mxu0
    %v1143 = vadd.f32 0.0, %v1142
    %1144 = vdwg.mxu0
    %v1145 = vadd.f32 %v999, %v1070
    %v1146 = vadd.f32 %v1000, %v1072
    %v1147 = vadd.f32 %v1001, %v1141
    %v1148 = vadd.f32 %v1002, %v1143
    %v1149 = vxor.u32 %v1145, 2147483648
    %v1150 = vmul.f32 %v1149, 1.442695
    %v1151 = vpow.pop %v1150
    %v1152 = vadd.f32 %v1151, 1.0
    %v1153 = vrcp.pop %v1152
    %v1154 = vmul.f32 1.0, %v1153
    %v1155 = vxor.u32 %v1146, 2147483648
    %v1156 = vmul.f32 %v1155, 1.442695
    %v1157 = vpow.pop %v1156
    %v1158 = vadd.f32 %v1157, 1.0
    %v1159 = vrcp.pop %v1158
    %v1160 = vmul.f32 1.0, %v1159
    %v1161 = vtanh.pop %v1147
    %v1162 = vxor.u32 %v1148, 2147483648
    %v1163 = vmul.f32 %v1162, 1.442695
    %v1164 = vpow.pop %v1163
    %v1165 = vadd.f32 %v1164, 1.0
    %v1166 = vrcp.pop %v1165
    %v1167 = vmul.f32 1.0, %v1166
    %v1168 = vmul.f32 %v1160, %v998
    %v1169 = vmul.f32 %v1154, %v1161
    %v1170 = vadd.f32 %v1168, %v1169
    %v1171 = vtanh.pop %v1170
    %v1172 = vmul.f32 %v1167, %v1171
    %v1173 = vsel %vm86, 1, 0
    %1174 = vset.pattern.permute.xlu0 0
    %1175 = vperm.xlu0 %1174, %v1173
    %v1176 = vpop.permute.xlu0 %1175
    %vm1177 = vcmp.eq.s32.totalorder %v1176, 1
    %v1178 = vsel %vm1177, %v1172, %v997
    %v1179 = vsel %vm1177, %v1170, %v998
    %v1180 = vld [vmem:[#allocation2 + $0x60] sm:$0xff]
    %v1181 = vld [vmem:[#allocation2 + $0x68] sm:$0xff]
    %v1182 = vld [vmem:[#allocation2 + $0x70] sm:$0xff]
    %v1183 = vld [vmem:[#allocation2 + $0x78] sm:$0xff]
    %1184 = vmatprep.subr.mxu0 %v578
    %1185 = vmatpush1.msra.mxu0 %v577
    %1186 = vmatprep.subr.mxu0 %v582
    %1187 = vmatpush1.msra.mxu0 %v581
    %1188 = vmatprep.subr.mxu0 %v586
    %1189 = vmatpush1.msra.mxu0 %v585
    %1190 = vmatprep.subr.mxu0 %v590
    %1191 = vmatpush1.msra.mxu0 %v589
    %1192 = vmatprep.subr.mxu0 %v594
    %1193 = vmatpush1.msra.mxu0 %v593
    %1194 = vmatprep.subr.mxu0 %v598
    %1195 = vmatpush1.msra.mxu0 %v597
    %1196 = vmatprep.subr.mxu0 %v602
    %1197 = vmatpush1.msra.mxu0 %v601
    %1198 = vmatprep.subr.mxu0 %v606
    %1199 = vmatpush1.msra.mxu0 %v605
    %1200 = vmatprep.subr.mxu0 %v610
    %1201 = vmatpush1.msra.mxu0 %v609
    %1202 = vmatprep.subr.mxu0 %v614
    %1203 = vmatpush1.msra.mxu0 %v613
    %1204 = vmatprep.subr.mxu0 %v618
    %1205 = vmatpush1.msra.mxu0 %v617
    %1206 = vmatprep.subr.mxu0 %v622
    %1207 = vmatpush1.msra.mxu0 %v621
    %1208 = vmatprep.subr.mxu0 %v626
    %1209 = vmatpush1.msra.mxu0 %v625
    %1210 = vmatprep.subr.mxu0 %v630
    %1211 = vmatpush1.msra.mxu0 %v629
    %1212 = vmatprep.subr.mxu0 %v634
    %1213 = vmatpush1.msra.mxu0 %v633
    %1214 = vmatprep.subr.mxu0 %v638
    %1215 = vmatpush1.msra.mxu0 %v637
    %1216 = vmatprep.subr.mxu0 0.0
    %1217 = vmatpush1.msra.mxu0 0.0
    %1218 = vmatprep.subr.mxu0 0.0
    %1219 = vmatpush1.msra.mxu0 0.0
    %1220 = vmatprep.subr.mxu0 0.0
    %1221 = vmatpush1.msra.mxu0 0.0
    %1222 = vmatprep.subr.mxu0 0.0
    %1223 = vmatpush1.msra.mxu0 0.0
    %1224 = vmatprep.subr.mxu0 0.0
    %1225 = vmatpush1.msra.mxu0 0.0
    %1226 = vmatprep.subr.mxu0 0.0
    %1227 = vmatpush1.msra.mxu0 0.0
    %1228 = vmatprep.subr.mxu0 0.0
    %1229 = vmatpush1.msra.mxu0 0.0
    %1230 = vmatprep.subr.mxu0 0.0
    %1231 = vmatpush1.msra.mxu0 0.0
    %1232 = vmatprep.subr.mxu0 0.0
    %1233 = vmatpush1.msra.mxu0 0.0
    %1234 = vmatprep.subr.mxu0 0.0
    %1235 = vmatpush1.msra.mxu0 0.0
    %1236 = vmatprep.subr.mxu0 0.0
    %1237 = vmatpush1.msra.mxu0 0.0
    %1238 = vmatprep.subr.mxu0 0.0
    %1239 = vmatpush1.msra.mxu0 0.0
    %1240 = vmatprep.subr.mxu0 0.0
    %1241 = vmatpush1.msra.mxu0 0.0
    %1242 = vmatprep.subr.mxu0 0.0
    %1243 = vmatpush1.msra.mxu0 0.0
    %1244 = vmatprep.subr.mxu0 0.0
    %1245 = vmatpush1.msra.mxu0 0.0
    %1246 = vmatprep.subr.mxu0 0.0
    %1247 = vmatpush1.msra.mxu0 0.0
    %1248 = vmatprep.mubr.f32.mxu0 0.0
    %1249 = vmatmul.mubr.f32.gmra.mrb[0].mxu0 %v1178
    %v1250 = vpop.f32.mrb[0].mxu0
    %v1251 = vadd.f32 0.0, %v1250
    %v1252 = vpop.f32.mrb[0].mxu0
    %v1253 = vadd.f32 0.0, %v1252
    %1254 = vdwg.mxu0
    %1255 = vmatprep.subr.mxu0 %v580
    %1256 = vmatpush1.msra.mxu0 %v579
    %1257 = vmatprep.subr.mxu0 %v584
    %1258 = vmatpush1.msra.mxu0 %v583
    %1259 = vmatprep.subr.mxu0 %v588
    %1260 = vmatpush1.msra.mxu0 %v587
    %1261 = vmatprep.subr.mxu0 %v592
    %1262 = vmatpush1.msra.mxu0 %v591
    %1263 = vmatprep.subr.mxu0 %v596
    %1264 = vmatpush1.msra.mxu0 %v595
    %1265 = vmatprep.subr.mxu0 %v600
    %1266 = vmatpush1.msra.mxu0 %v599
    %1267 = vmatprep.subr.mxu0 %v604
    %1268 = vmatpush1.msra.mxu0 %v603
    %1269 = vmatprep.subr.mxu0 %v608
    %1270 = vmatpush1.msra.mxu0 %v607
    %1271 = vmatprep.subr.mxu0 %v612
    %1272 = vmatpush1.msra.mxu0 %v611
    %1273 = vmatprep.subr.mxu0 %v616
    %1274 = vmatpush1.msra.mxu0 %v615
    %1275 = vmatprep.subr.mxu0 %v620
    %1276 = vmatpush1.msra.mxu0 %v619
    %1277 = vmatprep.subr.mxu0 %v624
    %1278 = vmatpush1.msra.mxu0 %v623
    %1279 = vmatprep.subr.mxu0 %v628
    %1280 = vmatpush1.msra.mxu0 %v627
    %1281 = vmatprep.subr.mxu0 %v632
    %1282 = vmatpush1.msra.mxu0 %v631
    %1283 = vmatprep.subr.mxu0 %v636
    %1284 = vmatpush1.msra.mxu0 %v635
    %1285 = vmatprep.subr.mxu0 %v640
    %1286 = vmatpush1.msra.mxu0 %v639
    %1287 = vmatprep.subr.mxu0 0.0
    %1288 = vmatpush1.msra.mxu0 0.0
    %1289 = vmatprep.subr.mxu0 0.0
    %1290 = vmatpush1.msra.mxu0 0.0
    %1291 = vmatprep.subr.mxu0 0.0
    %1292 = vmatpush1.msra.mxu0 0.0
    %1293 = vmatprep.subr.mxu0 0.0
    %1294 = vmatpush1.msra.mxu0 0.0
    %1295 = vmatprep.subr.mxu0 0.0
    %1296 = vmatpush1.msra.mxu0 0.0
    %1297 = vmatprep.subr.mxu0 0.0
    %1298 = vmatpush1.msra.mxu0 0.0
    %1299 = vmatprep.subr.mxu0 0.0
    %1300 = vmatpush1.msra.mxu0 0.0
    %1301 = vmatprep.subr.mxu0 0.0
    %1302 = vmatpush1.msra.mxu0 0.0
    %1303 = vmatprep.subr.mxu0 0.0
    %1304 = vmatpush1.msra.mxu0 0.0
    %1305 = vmatprep.subr.mxu0 0.0
    %1306 = vmatpush1.msra.mxu0 0.0
    %1307 = vmatprep.subr.mxu0 0.0
    %1308 = vmatpush1.msra.mxu0 0.0
    %1309 = vmatprep.subr.mxu0 0.0
    %1310 = vmatpush1.msra.mxu0 0.0
    %1311 = vmatprep.subr.mxu0 0.0
    %1312 = vmatpush1.msra.mxu0 0.0
    %1313 = vmatprep.subr.mxu0 0.0
    %1314 = vmatpush1.msra.mxu0 0.0
    %1315 = vmatprep.subr.mxu0 0.0
    %1316 = vmatpush1.msra.mxu0 0.0
    %1317 = vmatprep.subr.mxu0 0.0
    %1318 = vmatpush1.msra.mxu0 0.0
    %1319 = vmatprep.mubr.f32.mxu0 0.0
    %1320 = vmatmul.mubr.f32.gmra.mrb[0].mxu0 %v1178
    %v1321 = vpop.f32.mrb[0].mxu0
    %v1322 = vadd.f32 0.0, %v1321
    %v1323 = vpop.f32.mrb[0].mxu0
    %v1324 = vadd.f32 0.0, %v1323
    %1325 = vdwg.mxu0
    %v1326 = vadd.f32 %v1180, %v1251
    %v1327 = vadd.f32 %v1181, %v1253
    %v1328 = vadd.f32 %v1182, %v1322
    %v1329 = vadd.f32 %v1183, %v1324
    %v1330 = vxor.u32 %v1326, 2147483648
    %v1331 = vmul.f32 %v1330, 1.442695
    %v1332 = vpow.pop %v1331
    %v1333 = vadd.f32 %v1332, 1.0
    %v1334 = vrcp.pop %v1333
    %v1335 = vmul.f32 1.0, %v1334
    %v1336 = vxor.u32 %v1327, 2147483648
    %v1337 = vmul.f32 %v1336, 1.442695
    %v1338 = vpow.pop %v1337
    %v1339 = vadd.f32 %v1338, 1.0
    %v1340 = vrcp.pop %v1339
    %v1341 = vmul.f32 1.0, %v1340
    %v1342 = vtanh.pop %v1328
    %v1343 = vxor.u32 %v1329, 2147483648
    %v1344 = vmul.f32 %v1343, 1.442695
    %v1345 = vpow.pop %v1344
    %v1346 = vadd.f32 %v1345, 1.0
    %v1347 = vrcp.pop %v1346
    %v1348 = vmul.f32 1.0, %v1347
    %v1349 = vmul.f32 %v1341, %v1179
    %v1350 = vmul.f32 %v1335, %v1342
    %v1351 = vadd.f32 %v1349, %v1350
    %v1352 = vtanh.pop %v1351
    %v1353 = vmul.f32 %v1348, %v1352
    %v1354 = vsel %vm87, 1, 0
    %1355 = vset.pattern.permute.xlu0 0
    %1356 = vperm.xlu0 %1355, %v1354
    %v1357 = vpop.permute.xlu0 %1356
    %vm1358 = vcmp.eq.s32.totalorder %v1357, 1
    %v1359 = vsel %vm1358, %v1353, %v1178
    %v1360 = vsel %vm1358, %v1351, %v1179
    %v1361 = vld [vmem:[#allocation2 + $0x80] sm:$0xff]
    %v1362 = vld [vmem:[#allocation2 + $0x88] sm:$0xff]
    %v1363 = vld [vmem:[#allocation2 + $0x90] sm:$0xff]
    %v1364 = vld [vmem:[#allocation2 + $0x98] sm:$0xff]
    %1365 = vmatprep.subr.mxu0 %v578
    %1366 = vmatpush1.msra.mxu0 %v577
    %1367 = vmatprep.subr.mxu0 %v582
    %1368 = vmatpush1.msra.mxu0 %v581
    %1369 = vmatprep.subr.mxu0 %v586
    %1370 = vmatpush1.msra.mxu0 %v585
    %1371 = vmatprep.subr.mxu0 %v590
    %1372 = vmatpush1.msra.mxu0 %v589
    %1373 = vmatprep.subr.mxu0 %v594
    %1374 = vmatpush1.msra.mxu0 %v593
    %1375 = vmatprep.subr.mxu0 %v598
    %1376 = vmatpush1.msra.mxu0 %v597
    %1377 = vmatprep.subr.mxu0 %v602
    %1378 = vmatpush1.msra.mxu0 %v601
    %1379 = vmatprep.subr.mxu0 %v606
    %1380 = vmatpush1.msra.mxu0 %v605
    %1381 = vmatprep.subr.mxu0 %v610
    %1382 = vmatpush1.msra.mxu0 %v609
    %1383 = vmatprep.subr.mxu0 %v614
    %1384 = vmatpush1.msra.mxu0 %v613
    %1385 = vmatprep.subr.mxu0 %v618
    %1386 = vmatpush1.msra.mxu0 %v617
    %1387 = vmatprep.subr.mxu0 %v622
    %1388 = vmatpush1.msra.mxu0 %v621
    %1389 = vmatprep.subr.mxu0 %v626
    %1390 = vmatpush1.msra.mxu0 %v625
    %1391 = vmatprep.subr.mxu0 %v630
    %1392 = vmatpush1.msra.mxu0 %v629
    %1393 = vmatprep.subr.mxu0 %v634
    %1394 = vmatpush1.msra.mxu0 %v633
    %1395 = vmatprep.subr.mxu0 %v638
    %1396 = vmatpush1.msra.mxu0 %v637
    %1397 = vmatprep.subr.mxu0 0.0
    %1398 = vmatpush1.msra.mxu0 0.0
    %1399 = vmatprep.subr.mxu0 0.0
    %1400 = vmatpush1.msra.mxu0 0.0
    %1401 = vmatprep.subr.mxu0 0.0
    %1402 = vmatpush1.msra.mxu0 0.0
    %1403 = vmatprep.subr.mxu0 0.0
    %1404 = vmatpush1.msra.mxu0 0.0
    %1405 = vmatprep.subr.mxu0 0.0
    %1406 = vmatpush1.msra.mxu0 0.0
    %1407 = vmatprep.subr.mxu0 0.0
    %1408 = vmatpush1.msra.mxu0 0.0
    %1409 = vmatprep.subr.mxu0 0.0
    %1410 = vmatpush1.msra.mxu0 0.0
    %1411 = vmatprep.subr.mxu0 0.0
    %1412 = vmatpush1.msra.mxu0 0.0
    %1413 = vmatprep.subr.mxu0 0.0
    %1414 = vmatpush1.msra.mxu0 0.0
    %1415 = vmatprep.subr.mxu0 0.0
    %1416 = vmatpush1.msra.mxu0 0.0
    %1417 = vmatprep.subr.mxu0 0.0
    %1418 = vmatpush1.msra.mxu0 0.0
    %1419 = vmatprep.subr.mxu0 0.0
    %1420 = vmatpush1.msra.mxu0 0.0
    %1421 = vmatprep.subr.mxu0 0.0
    %1422 = vmatpush1.msra.mxu0 0.0
    %1423 = vmatprep.subr.mxu0 0.0
    %1424 = vmatpush1.msra.mxu0 0.0
    %1425 = vmatprep.subr.mxu0 0.0
    %1426 = vmatpush1.msra.mxu0 0.0
    %1427 = vmatprep.subr.mxu0 0.0
    %1428 = vmatpush1.msra.mxu0 0.0
    %1429 = vmatprep.mubr.f32.mxu0 0.0
    %1430 = vmatmul.mubr.f32.gmra.mrb[0].mxu0 %v1359
    %v1431 = vpop.f32.mrb[0].mxu0
    %v1432 = vadd.f32 0.0, %v1431
    %v1433 = vpop.f32.mrb[0].mxu0
    %v1434 = vadd.f32 0.0, %v1433
    %1435 = vdwg.mxu0
    %1436 = vmatprep.subr.mxu0 %v580
    %1437 = vmatpush1.msra.mxu0 %v579
    %1438 = vmatprep.subr.mxu0 %v584
    %1439 = vmatpush1.msra.mxu0 %v583
    %1440 = vmatprep.subr.mxu0 %v588
    %1441 = vmatpush1.msra.mxu0 %v587
    %1442 = vmatprep.subr.mxu0 %v592
    %1443 = vmatpush1.msra.mxu0 %v591
    %1444 = vmatprep.subr.mxu0 %v596
    %1445 = vmatpush1.msra.mxu0 %v595
    %1446 = vmatprep.subr.mxu0 %v600
    %1447 = vmatpush1.msra.mxu0 %v599
    %1448 = vmatprep.subr.mxu0 %v604
    %1449 = vmatpush1.msra.mxu0 %v603
    %1450 = vmatprep.subr.mxu0 %v608
    %1451 = vmatpush1.msra.mxu0 %v607
    %1452 = vmatprep.subr.mxu0 %v612
    %1453 = vmatpush1.msra.mxu0 %v611
    %1454 = vmatprep.subr.mxu0 %v616
    %1455 = vmatpush1.msra.mxu0 %v615
    %1456 = vmatprep.subr.mxu0 %v620
    %1457 = vmatpush1.msra.mxu0 %v619
    %1458 = vmatprep.subr.mxu0 %v624
    %1459 = vmatpush1.msra.mxu0 %v623
    %1460 = vmatprep.subr.mxu0 %v628
    %1461 = vmatpush1.msra.mxu0 %v627
    %1462 = vmatprep.subr.mxu0 %v632
    %1463 = vmatpush1.msra.mxu0 %v631
    %1464 = vmatprep.subr.mxu0 %v636
    %1465 = vmatpush1.msra.mxu0 %v635
    %1466 = vmatprep.subr.mxu0 %v640
    %1467 = vmatpush1.msra.mxu0 %v639
    %1468 = vmatprep.subr.mxu0 0.0
    %1469 = vmatpush1.msra.mxu0 0.0
    %1470 = vmatprep.subr.mxu0 0.0
    %1471 = vmatpush1.msra.mxu0 0.0
    %1472 = vmatprep.subr.mxu0 0.0
    %1473 = vmatpush1.msra.mxu0 0.0
    %1474 = vmatprep.subr.mxu0 0.0
    %1475 = vmatpush1.msra.mxu0 0.0
    %1476 = vmatprep.subr.mxu0 0.0
    %1477 = vmatpush1.msra.mxu0 0.0
    %1478 = vmatprep.subr.mxu0 0.0
    %1479 = vmatpush1.msra.mxu0 0.0
    %1480 = vmatprep.subr.mxu0 0.0
    %1481 = vmatpush1.msra.mxu0 0.0
    %1482 = vmatprep.subr.mxu0 0.0
    %1483 = vmatpush1.msra.mxu0 0.0
    %1484 = vmatprep.subr.mxu0 0.0
    %1485 = vmatpush1.msra.mxu0 0.0
    %1486 = vmatprep.subr.mxu0 0.0
    %1487 = vmatpush1.msra.mxu0 0.0
    %1488 = vmatprep.subr.mxu0 0.0
    %1489 = vmatpush1.msra.mxu0 0.0
    %1490 = vmatprep.subr.mxu0 0.0
    %1491 = vmatpush1.msra.mxu0 0.0
    %1492 = vmatprep.subr.mxu0 0.0
    %1493 = vmatpush1.msra.mxu0 0.0
    %1494 = vmatprep.subr.mxu0 0.0
    %1495 = vmatpush1.msra.mxu0 0.0
    %1496 = vmatprep.subr.mxu0 0.0
    %1497 = vmatpush1.msra.mxu0 0.0
    %1498 = vmatprep.subr.mxu0 0.0
    %1499 = vmatpush1.msra.mxu0 0.0
    %1500 = vmatprep.mubr.f32.mxu0 0.0
    %1501 = vmatmul.mubr.f32.gmra.mrb[0].mxu0 %v1359
    %v1502 = vpop.f32.mrb[0].mxu0
    %v1503 = vadd.f32 0.0, %v1502
    %v1504 = vpop.f32.mrb[0].mxu0
    %v1505 = vadd.f32 0.0, %v1504
    %1506 = vdwg.mxu0
    %v1507 = vadd.f32 %v1361, %v1432
    %v1508 = vadd.f32 %v1362, %v1434
    %v1509 = vadd.f32 %v1363, %v1503
    %v1510 = vadd.f32 %v1364, %v1505
    %v1511 = vxor.u32 %v1507, 2147483648
    %v1512 = vmul.f32 %v1511, 1.442695
    %v1513 = vpow.pop %v1512
    %v1514 = vadd.f32 %v1513, 1.0
    %v1515 = vrcp.pop %v1514
    %v1516 = vmul.f32 1.0, %v1515
    %v1517 = vxor.u32 %v1508, 2147483648
    %v1518 = vmul.f32 %v1517, 1.442695
    %v1519 = vpow.pop %v1518
    %v1520 = vadd.f32 %v1519, 1.0
    %v1521 = vrcp.pop %v1520
    %v1522 = vmul.f32 1.0, %v1521
    %v1523 = vtanh.pop %v1509
    %v1524 = vxor.u32 %v1510, 2147483648
    %v1525 = vmul.f32 %v1524, 1.442695
    %v1526 = vpow.pop %v1525
    %v1527 = vadd.f32 %v1526, 1.0
    %v1528 = vrcp.pop %v1527
    %v1529 = vmul.f32 1.0, %v1528
    %v1530 = vmul.f32 %v1522, %v1360
    %v1531 = vmul.f32 %v1516, %v1523
    %v1532 = vadd.f32 %v1530, %v1531
    %v1533 = vtanh.pop %v1532
    %v1534 = vmul.f32 %v1529, %v1533
    %v1535 = vsel %vm88, 1, 0
    %1536 = vset.pattern.permute.xlu0 0
    %1537 = vperm.xlu0 %1536, %v1535
    %v1538 = vpop.permute.xlu0 %1537
    %vm1539 = vcmp.eq.s32.totalorder %v1538, 1
    %v1540 = vsel %vm1539, %v1534, %v1359
    %v1541 = vsel %vm1539, %v1532, %v1360
    %v1542 = vld [vmem:[#allocation2 + $0xa0] sm:$0xff]
    %v1543 = vld [vmem:[#allocation2 + $0xa8] sm:$0xff]
    %v1544 = vld [vmem:[#allocation2 + $0xb0] sm:$0xff]
    %v1545 = vld [vmem:[#allocation2 + $0xb8] sm:$0xff]
    %1546 = vmatprep.subr.mxu0 %v578
    %1547 = vmatpush1.msra.mxu0 %v577
    %1548 = vmatprep.subr.mxu0 %v582
    %1549 = vmatpush1.msra.mxu0 %v581
    %1550 = vmatprep.subr.mxu0 %v586
    %1551 = vmatpush1.msra.mxu0 %v585
    %1552 = vmatprep.subr.mxu0 %v590
    %1553 = vmatpush1.msra.mxu0 %v589
    %1554 = vmatprep.subr.mxu0 %v594
    %1555 = vmatpush1.msra.mxu0 %v593
    %1556 = vmatprep.subr.mxu0 %v598
    %1557 = vmatpush1.msra.mxu0 %v597
    %1558 = vmatprep.subr.mxu0 %v602
    %1559 = vmatpush1.msra.mxu0 %v601
    %1560 = vmatprep.subr.mxu0 %v606
    %1561 = vmatpush1.msra.mxu0 %v605
    %1562 = vmatprep.subr.mxu0 %v610
    %1563 = vmatpush1.msra.mxu0 %v609
    %1564 = vmatprep.subr.mxu0 %v614
    %1565 = vmatpush1.msra.mxu0 %v613
    %1566 = vmatprep.subr.mxu0 %v618
    %1567 = vmatpush1.msra.mxu0 %v617
    %1568 = vmatprep.subr.mxu0 %v622
    %1569 = vmatpush1.msra.mxu0 %v621
    %1570 = vmatprep.subr.mxu0 %v626
    %1571 = vmatpush1.msra.mxu0 %v625
    %1572 = vmatprep.subr.mxu0 %v630
    %1573 = vmatpush1.msra.mxu0 %v629
    %1574 = vmatprep.subr.mxu0 %v634
    %1575 = vmatpush1.msra.mxu0 %v633
    %1576 = vmatprep.subr.mxu0 %v638
    %1577 = vmatpush1.msra.mxu0 %v637
    %1578 = vmatprep.subr.mxu0 0.0
    %1579 = vmatpush1.msra.mxu0 0.0
    %1580 = vmatprep.subr.mxu0 0.0
    %1581 = vmatpush1.msra.mxu0 0.0
    %1582 = vmatprep.subr.mxu0 0.0
    %1583 = vmatpush1.msra.mxu0 0.0
    %1584 = vmatprep.subr.mxu0 0.0
    %1585 = vmatpush1.msra.mxu0 0.0
    %1586 = vmatprep.subr.mxu0 0.0
    %1587 = vmatpush1.msra.mxu0 0.0
    %1588 = vmatprep.subr.mxu0 0.0
    %1589 = vmatpush1.msra.mxu0 0.0
    %1590 = vmatprep.subr.mxu0 0.0
    %1591 = vmatpush1.msra.mxu0 0.0
    %1592 = vmatprep.subr.mxu0 0.0
    %1593 = vmatpush1.msra.mxu0 0.0
    %1594 = vmatprep.subr.mxu0 0.0
    %1595 = vmatpush1.msra.mxu0 0.0
    %1596 = vmatprep.subr.mxu0 0.0
    %1597 = vmatpush1.msra.mxu0 0.0
    %1598 = vmatprep.subr.mxu0 0.0
    %1599 = vmatpush1.msra.mxu0 0.0
    %1600 = vmatprep.subr.mxu0 0.0
    %1601 = vmatpush1.msra.mxu0 0.0
    %1602 = vmatprep.subr.mxu0 0.0
    %1603 = vmatpush1.msra.mxu0 0.0
    %1604 = vmatprep.subr.mxu0 0.0
    %1605 = vmatpush1.msra.mxu0 0.0
    %1606 = vmatprep.subr.mxu0 0.0
    %1607 = vmatpush1.msra.mxu0 0.0
    %1608 = vmatprep.subr.mxu0 0.0
    %1609 = vmatpush1.msra.mxu0 0.0
    %1610 = vmatprep.mubr.f32.mxu0 0.0
    %1611 = vmatmul.mubr.f32.gmra.mrb[0].mxu0 %v1540
    %v1612 = vpop.f32.mrb[0].mxu0
    %v1613 = vadd.f32 0.0, %v1612
    %v1614 = vpop.f32.mrb[0].mxu0
    %v1615 = vadd.f32 0.0, %v1614
    %1616 = vdwg.mxu0
    %1617 = vmatprep.subr.mxu0 %v580
    %1618 = vmatpush1.msra.mxu0 %v579
    %1619 = vmatprep.subr.mxu0 %v584
    %1620 = vmatpush1.msra.mxu0 %v583
    %1621 = vmatprep.subr.mxu0 %v588
    %1622 = vmatpush1.msra.mxu0 %v587
    %1623 = vmatprep.subr.mxu0 %v592
    %1624 = vmatpush1.msra.mxu0 %v591
    %1625 = vmatprep.subr.mxu0 %v596
    %1626 = vmatpush1.msra.mxu0 %v595
    %1627 = vmatprep.subr.mxu0 %v600
    %1628 = vmatpush1.msra.mxu0 %v599
    %1629 = vmatprep.subr.mxu0 %v604
    %1630 = vmatpush1.msra.mxu0 %v603
    %1631 = vmatprep.subr.mxu0 %v608
    %1632 = vmatpush1.msra.mxu0 %v607
    %1633 = vmatprep.subr.mxu0 %v612
    %1634 = vmatpush1.msra.mxu0 %v611
    %1635 = vmatprep.subr.mxu0 %v616
    %1636 = vmatpush1.msra.mxu0 %v615
    %1637 = vmatprep.subr.mxu0 %v620
    %1638 = vmatpush1.msra.mxu0 %v619
    %1639 = vmatprep.subr.mxu0 %v624
    %1640 = vmatpush1.msra.mxu0 %v623
    %1641 = vmatprep.subr.mxu0 %v628
    %1642 = vmatpush1.msra.mxu0 %v627
    %1643 = vmatprep.subr.mxu0 %v632
    %1644 = vmatpush1.msra.mxu0 %v631
    %1645 = vmatprep.subr.mxu0 %v636
    %1646 = vmatpush1.msra.mxu0 %v635
    %1647 = vmatprep.subr.mxu0 %v640
    %1648 = vmatpush1.msra.mxu0 %v639
    %1649 = vmatprep.subr.mxu0 0.0
    %1650 = vmatpush1.msra.mxu0 0.0
    %1651 = vmatprep.subr.mxu0 0.0
    %1652 = vmatpush1.msra.mxu0 0.0
    %1653 = vmatprep.subr.mxu0 0.0
    %1654 = vmatpush1.msra.mxu0 0.0
    %1655 = vmatprep.subr.mxu0 0.0
    %1656 = vmatpush1.msra.mxu0 0.0
    %1657 = vmatprep.subr.mxu0 0.0
    %1658 = vmatpush1.msra.mxu0 0.0
    %1659 = vmatprep.subr.mxu0 0.0
    %1660 = vmatpush1.msra.mxu0 0.0
    %1661 = vmatprep.subr.mxu0 0.0
    %1662 = vmatpush1.msra.mxu0 0.0
    %1663 = vmatprep.subr.mxu0 0.0
    %1664 = vmatpush1.msra.mxu0 0.0
    %1665 = vmatprep.subr.mxu0 0.0
    %1666 = vmatpush1.msra.mxu0 0.0
    %1667 = vmatprep.subr.mxu0 0.0
    %1668 = vmatpush1.msra.mxu0 0.0
    %1669 = vmatprep.subr.mxu0 0.0
    %1670 = vmatpush1.msra.mxu0 0.0
    %1671 = vmatprep.subr.mxu0 0.0
    %1672 = vmatpush1.msra.mxu0 0.0
    %1673 = vmatprep.subr.mxu0 0.0
    %1674 = vmatpush1.msra.mxu0 0.0
    %1675 = vmatprep.subr.mxu0 0.0
    %1676 = vmatpush1.msra.mxu0 0.0
    %1677 = vmatprep.subr.mxu0 0.0
    %1678 = vmatpush1.msra.mxu0 0.0
    %1679 = vmatprep.subr.mxu0 0.0
    %1680 = vmatpush1.msra.mxu0 0.0
    %1681 = vmatprep.mubr.f32.mxu0 0.0
    %1682 = vmatmul.mubr.f32.gmra.mrb[0].mxu0 %v1540
    %v1683 = vpop.f32.mrb[0].mxu0
    %v1684 = vadd.f32 0.0, %v1683
    %v1685 = vpop.f32.mrb[0].mxu0
    %v1686 = vadd.f32 0.0, %v1685
    %1687 = vdwg.mxu0
    %v1688 = vadd.f32 %v1542, %v1613
    %v1689 = vadd.f32 %v1543, %v1615
    %v1690 = vadd.f32 %v1544, %v1684
    %v1691 = vadd.f32 %v1545, %v1686
    %v1692 = vxor.u32 %v1688, 2147483648
    %v1693 = vmul.f32 %v1692, 1.442695
    %v1694 = vpow.pop %v1693
    %v1695 = vadd.f32 %v1694, 1.0
    %v1696 = vrcp.pop %v1695
    %v1697 = vmul.f32 1.0, %v1696
    %v1698 = vxor.u32 %v1689, 2147483648
    %v1699 = vmul.f32 %v1698, 1.442695
    %v1700 = vpow.pop %v1699
    %v1701 = vadd.f32 %v1700, 1.0
    %v1702 = vrcp.pop %v1701
    %v1703 = vmul.f32 1.0, %v1702
    %v1704 = vtanh.pop %v1690
    %v1705 = vxor.u32 %v1691, 2147483648
    %v1706 = vmul.f32 %v1705, 1.442695
    %v1707 = vpow.pop %v1706
    %v1708 = vadd.f32 %v1707, 1.0
    %v1709 = vrcp.pop %v1708
    %v1710 = vmul.f32 1.0, %v1709
    %v1711 = vmul.f32 %v1703, %v1541
    %v1712 = vmul.f32 %v1697, %v1704
    %v1713 = vadd.f32 %v1711, %v1712
    %v1714 = vtanh.pop %v1713
    %v1715 = vmul.f32 %v1710, %v1714
    %v1716 = vsel %vm89, 1, 0
    %1717 = vset.pattern.permute.xlu0 0
    %1718 = vperm.xlu0 %1717, %v1716
    %v1719 = vpop.permute.xlu0 %1718
    %vm1720 = vcmp.eq.s32.totalorder %v1719, 1
    %v1721 = vsel %vm1720, %v1715, %v1540
    %v1722 = vsel %vm1720, %v1713, %v1541
    %v1723 = vld [vmem:[#allocation2 + $0xc0] sm:$0xff]
    %v1724 = vld [vmem:[#allocation2 + $0xc8] sm:$0xff]
    %v1725 = vld [vmem:[#allocation2 + $0xd0] sm:$0xff]
    %v1726 = vld [vmem:[#allocation2 + $0xd8] sm:$0xff]
    %1727 = vmatprep.subr.mxu0 %v578
    %1728 = vmatpush1.msra.mxu0 %v577
    %1729 = vmatprep.subr.mxu0 %v582
    %1730 = vmatpush1.msra.mxu0 %v581
    %1731 = vmatprep.subr.mxu0 %v586
    %1732 = vmatpush1.msra.mxu0 %v585
    %1733 = vmatprep.subr.mxu0 %v590
    %1734 = vmatpush1.msra.mxu0 %v589
    %1735 = vmatprep.subr.mxu0 %v594
    %1736 = vmatpush1.msra.mxu0 %v593
    %1737 = vmatprep.subr.mxu0 %v598
    %1738 = vmatpush1.msra.mxu0 %v597
    %1739 = vmatprep.subr.mxu0 %v602
    %1740 = vmatpush1.msra.mxu0 %v601
    %1741 = vmatprep.subr.mxu0 %v606
    %1742 = vmatpush1.msra.mxu0 %v605
    %1743 = vmatprep.subr.mxu0 %v610
    %1744 = vmatpush1.msra.mxu0 %v609
    %1745 = vmatprep.subr.mxu0 %v614
    %1746 = vmatpush1.msra.mxu0 %v613
    %1747 = vmatprep.subr.mxu0 %v618
    %1748 = vmatpush1.msra.mxu0 %v617
    %1749 = vmatprep.subr.mxu0 %v622
    %1750 = vmatpush1.msra.mxu0 %v621
    %1751 = vmatprep.subr.mxu0 %v626
    %1752 = vmatpush1.msra.mxu0 %v625
    %1753 = vmatprep.subr.mxu0 %v630
    %1754 = vmatpush1.msra.mxu0 %v629
    %1755 = vmatprep.subr.mxu0 %v634
    %1756 = vmatpush1.msra.mxu0 %v633
    %1757 = vmatprep.subr.mxu0 %v638
    %1758 = vmatpush1.msra.mxu0 %v637
    %1759 = vmatprep.subr.mxu0 0.0
    %1760 = vmatpush1.msra.mxu0 0.0
    %1761 = vmatprep.subr.mxu0 0.0
    %1762 = vmatpush1.msra.mxu0 0.0
    %1763 = vmatprep.subr.mxu0 0.0
    %1764 = vmatpush1.msra.mxu0 0.0
    %1765 = vmatprep.subr.mxu0 0.0
    %1766 = vmatpush1.msra.mxu0 0.0
    %1767 = vmatprep.subr.mxu0 0.0
    %1768 = vmatpush1.msra.mxu0 0.0
    %1769 = vmatprep.subr.mxu0 0.0
    %1770 = vmatpush1.msra.mxu0 0.0
    %1771 = vmatprep.subr.mxu0 0.0
    %1772 = vmatpush1.msra.mxu0 0.0
    %1773 = vmatprep.subr.mxu0 0.0
    %1774 = vmatpush1.msra.mxu0 0.0
    %1775 = vmatprep.subr.mxu0 0.0
    %1776 = vmatpush1.msra.mxu0 0.0
    %1777 = vmatprep.subr.mxu0 0.0
    %1778 = vmatpush1.msra.mxu0 0.0
    %1779 = vmatprep.subr.mxu0 0.0
    %1780 = vmatpush1.msra.mxu0 0.0
    %1781 = vmatprep.subr.mxu0 0.0
    %1782 = vmatpush1.msra.mxu0 0.0
    %1783 = vmatprep.subr.mxu0 0.0
    %1784 = vmatpush1.msra.mxu0 0.0
    %1785 = vmatprep.subr.mxu0 0.0
    %1786 = vmatpush1.msra.mxu0 0.0
    %1787 = vmatprep.subr.mxu0 0.0
    %1788 = vmatpush1.msra.mxu0 0.0
    %1789 = vmatprep.subr.mxu0 0.0
    %1790 = vmatpush1.msra.mxu0 0.0
    %1791 = vmatprep.mubr.f32.mxu0 0.0
    %1792 = vmatmul.mubr.f32.gmra.mrb[0].mxu0 %v1721
    %v1793 = vpop.f32.mrb[0].mxu0
    %v1794 = vadd.f32 0.0, %v1793
    %v1795 = vpop.f32.mrb[0].mxu0
    %v1796 = vadd.f32 0.0, %v1795
    %1797 = vdwg.mxu0
    %1798 = vmatprep.subr.mxu0 %v580
    %1799 = vmatpush1.msra.mxu0 %v579
    %1800 = vmatprep.subr.mxu0 %v584
    %1801 = vmatpush1.msra.mxu0 %v583
    %1802 = vmatprep.subr.mxu0 %v588
    %1803 = vmatpush1.msra.mxu0 %v587
    %1804 = vmatprep.subr.mxu0 %v592
    %1805 = vmatpush1.msra.mxu0 %v591
    %1806 = vmatprep.subr.mxu0 %v596
    %1807 = vmatpush1.msra.mxu0 %v595
    %1808 = vmatprep.subr.mxu0 %v600
    %1809 = vmatpush1.msra.mxu0 %v599
    %1810 = vmatprep.subr.mxu0 %v604
    %1811 = vmatpush1.msra.mxu0 %v603
    %1812 = vmatprep.subr.mxu0 %v608
    %1813 = vmatpush1.msra.mxu0 %v607
    %1814 = vmatprep.subr.mxu0 %v612
    %1815 = vmatpush1.msra.mxu0 %v611
    %1816 = vmatprep.subr.mxu0 %v616
    %1817 = vmatpush1.msra.mxu0 %v615
    %1818 = vmatprep.subr.mxu0 %v620
    %1819 = vmatpush1.msra.mxu0 %v619
    %1820 = vmatprep.subr.mxu0 %v624
    %1821 = vmatpush1.msra.mxu0 %v623
    %1822 = vmatprep.subr.mxu0 %v628
    %1823 = vmatpush1.msra.mxu0 %v627
    %1824 = vmatprep.subr.mxu0 %v632
    %1825 = vmatpush1.msra.mxu0 %v631
    %1826 = vmatprep.subr.mxu0 %v636
    %1827 = vmatpush1.msra.mxu0 %v635
    %1828 = vmatprep.subr.mxu0 %v640
    %1829 = vmatpush1.msra.mxu0 %v639
    %1830 = vmatprep.subr.mxu0 0.0
    %1831 = vmatpush1.msra.mxu0 0.0
    %1832 = vmatprep.subr.mxu0 0.0
    %1833 = vmatpush1.msra.mxu0 0.0
    %1834 = vmatprep.subr.mxu0 0.0
    %1835 = vmatpush1.msra.mxu0 0.0
    %1836 = vmatprep.subr.mxu0 0.0
    %1837 = vmatpush1.msra.mxu0 0.0
    %1838 = vmatprep.subr.mxu0 0.0
    %1839 = vmatpush1.msra.mxu0 0.0
    %1840 = vmatprep.subr.mxu0 0.0
    %1841 = vmatpush1.msra.mxu0 0.0
    %1842 = vmatprep.subr.mxu0 0.0
    %1843 = vmatpush1.msra.mxu0 0.0
    %1844 = vmatprep.subr.mxu0 0.0
    %1845 = vmatpush1.msra.mxu0 0.0
    %1846 = vmatprep.subr.mxu0 0.0
    %1847 = vmatpush1.msra.mxu0 0.0
    %1848 = vmatprep.subr.mxu0 0.0
    %1849 = vmatpush1.msra.mxu0 0.0
    %1850 = vmatprep.subr.mxu0 0.0
    %1851 = vmatpush1.msra.mxu0 0.0
    %1852 = vmatprep.subr.mxu0 0.0
    %1853 = vmatpush1.msra.mxu0 0.0
    %1854 = vmatprep.subr.mxu0 0.0
    %1855 = vmatpush1.msra.mxu0 0.0
    %1856 = vmatprep.subr.mxu0 0.0
    %1857 = vmatpush1.msra.mxu0 0.0
    %1858 = vmatprep.subr.mxu0 0.0
    %1859 = vmatpush1.msra.mxu0 0.0
    %1860 = vmatprep.subr.mxu0 0.0
    %1861 = vmatpush1.msra.mxu0 0.0
    %1862 = vmatprep.mubr.f32.mxu0 0.0
    %1863 = vmatmul.mubr.f32.gmra.mrb[0].mxu0 %v1721
    %v1864 = vpop.f32.mrb[0].mxu0
    %v1865 = vadd.f32 0.0, %v1864
    %v1866 = vpop.f32.mrb[0].mxu0
    %v1867 = vadd.f32 0.0, %v1866
    %1868 = vdwg.mxu0
    %v1869 = vadd.f32 %v1723, %v1794
    %v1870 = vadd.f32 %v1724, %v1796
    %v1871 = vadd.f32 %v1725, %v1865
    %v1872 = vadd.f32 %v1726, %v1867
    %v1873 = vxor.u32 %v1869, 2147483648
    %v1874 = vmul.f32 %v1873, 1.442695
    %v1875 = vpow.pop %v1874
    %v1876 = vadd.f32 %v1875, 1.0
    %v1877 = vrcp.pop %v1876
    %v1878 = vmul.f32 1.0, %v1877
    %v1879 = vxor.u32 %v1870, 2147483648
    %v1880 = vmul.f32 %v1879, 1.442695
    %v1881 = vpow.pop %v1880
    %v1882 = vadd.f32 %v1881, 1.0
    %v1883 = vrcp.pop %v1882
    %v1884 = vmul.f32 1.0, %v1883
    %v1885 = vtanh.pop %v1871
    %v1886 = vxor.u32 %v1872, 2147483648
    %v1887 = vmul.f32 %v1886, 1.442695
    %v1888 = vpow.pop %v1887
    %v1889 = vadd.f32 %v1888, 1.0
    %v1890 = vrcp.pop %v1889
    %v1891 = vmul.f32 1.0, %v1890
    %v1892 = vmul.f32 %v1884, %v1722
    %v1893 = vmul.f32 %v1878, %v1885
    %v1894 = vadd.f32 %v1892, %v1893
    %v1895 = vtanh.pop %v1894
    %v1896 = vmul.f32 %v1891, %v1895
    %v1897 = vsel %vm90, 1, 0
    %1898 = vset.pattern.permute.xlu0 0
    %1899 = vperm.xlu0 %1898, %v1897
    %v1900 = vpop.permute.xlu0 %1899
    %vm1901 = vcmp.eq.s32.totalorder %v1900, 1
    %v1902 = vsel %vm1901, %v1896, %v1721
    %v1903 = vsel %vm1901, %v1894, %v1722
    %v1904 = vld [vmem:[#allocation2 + $0xe0] sm:$0xff]
    %v1905 = vld [vmem:[#allocation2 + $0xe8] sm:$0xff]
    %v1906 = vld [vmem:[#allocation2 + $0xf0] sm:$0xff]
    %v1907 = vld [vmem:[#allocation2 + $0xf8] sm:$0xff]
    %1908 = vmatprep.subr.mxu0 %v578
    %1909 = vmatpush1.msra.mxu0 %v577
    %1910 = vmatprep.subr.mxu0 %v582
    %1911 = vmatpush1.msra.mxu0 %v581
    %1912 = vmatprep.subr.mxu0 %v586
    %1913 = vmatpush1.msra.mxu0 %v585
    %1914 = vmatprep.subr.mxu0 %v590
    %1915 = vmatpush1.msra.mxu0 %v589
    %1916 = vmatprep.subr.mxu0 %v594
    %1917 = vmatpush1.msra.mxu0 %v593
    %1918 = vmatprep.subr.mxu0 %v598
    %1919 = vmatpush1.msra.mxu0 %v597
    %1920 = vmatprep.subr.mxu0 %v602
    %1921 = vmatpush1.msra.mxu0 %v601
    %1922 = vmatprep.subr.mxu0 %v606
    %1923 = vmatpush1.msra.mxu0 %v605
    %1924 = vmatprep.subr.mxu0 %v610
    %1925 = vmatpush1.msra.mxu0 %v609
    %1926 = vmatprep.subr.mxu0 %v614
    %1927 = vmatpush1.msra.mxu0 %v613
    %1928 = vmatprep.subr.mxu0 %v618
    %1929 = vmatpush1.msra.mxu0 %v617
    %1930 = vmatprep.subr.mxu0 %v622
    %1931 = vmatpush1.msra.mxu0 %v621
    %1932 = vmatprep.subr.mxu0 %v626
    %1933 = vmatpush1.msra.mxu0 %v625
    %1934 = vmatprep.subr.mxu0 %v630
    %1935 = vmatpush1.msra.mxu0 %v629
    %1936 = vmatprep.subr.mxu0 %v634
    %1937 = vmatpush1.msra.mxu0 %v633
    %1938 = vmatprep.subr.mxu0 %v638
    %1939 = vmatpush1.msra.mxu0 %v637
    %1940 = vmatprep.subr.mxu0 0.0
    %1941 = vmatpush1.msra.mxu0 0.0
    %1942 = vmatprep.subr.mxu0 0.0
    %1943 = vmatpush1.msra.mxu0 0.0
    %1944 = vmatprep.subr.mxu0 0.0
    %1945 = vmatpush1.msra.mxu0 0.0
    %1946 = vmatprep.subr.mxu0 0.0
    %1947 = vmatpush1.msra.mxu0 0.0
    %1948 = vmatprep.subr.mxu0 0.0
    %1949 = vmatpush1.msra.mxu0 0.0
    %1950 = vmatprep.subr.mxu0 0.0
    %1951 = vmatpush1.msra.mxu0 0.0
    %1952 = vmatprep.subr.mxu0 0.0
    %1953 = vmatpush1.msra.mxu0 0.0
    %1954 = vmatprep.subr.mxu0 0.0
    %1955 = vmatpush1.msra.mxu0 0.0
    %1956 = vmatprep.subr.mxu0 0.0
    %1957 = vmatpush1.msra.mxu0 0.0
    %1958 = vmatprep.subr.mxu0 0.0
    %1959 = vmatpush1.msra.mxu0 0.0
    %1960 = vmatprep.subr.mxu0 0.0
    %1961 = vmatpush1.msra.mxu0 0.0
    %1962 = vmatprep.subr.mxu0 0.0
    %1963 = vmatpush1.msra.mxu0 0.0
    %1964 = vmatprep.subr.mxu0 0.0
    %1965 = vmatpush1.msra.mxu0 0.0
    %1966 = vmatprep.subr.mxu0 0.0
    %1967 = vmatpush1.msra.mxu0 0.0
    %1968 = vmatprep.subr.mxu0 0.0
    %1969 = vmatpush1.msra.mxu0 0.0
    %1970 = vmatprep.subr.mxu0 0.0
    %1971 = vmatpush1.msra.mxu0 0.0
    %1972 = vmatprep.mubr.f32.mxu0 0.0
    %1973 = vmatmul.mubr.f32.gmra.mrb[0].mxu0 %v1902
    %v1974 = vpop.f32.mrb[0].mxu0
    %v1975 = vadd.f32 0.0, %v1974
    %v1976 = vpop.f32.mrb[0].mxu0
    %v1977 = vadd.f32 0.0, %v1976
    %1978 = vdwg.mxu0
    %1979 = vmatprep.subr.mxu0 %v580
    %1980 = vmatpush1.msra.mxu0 %v579
    %1981 = vmatprep.subr.mxu0 %v584
    %1982 = vmatpush1.msra.mxu0 %v583
    %1983 = vmatprep.subr.mxu0 %v588
    %1984 = vmatpush1.msra.mxu0 %v587
    %1985 = vmatprep.subr.mxu0 %v592
    %1986 = vmatpush1.msra.mxu0 %v591
    %1987 = vmatprep.subr.mxu0 %v596
    %1988 = vmatpush1.msra.mxu0 %v595
    %1989 = vmatprep.subr.mxu0 %v600
    %1990 = vmatpush1.msra.mxu0 %v599
    %1991 = vmatprep.subr.mxu0 %v604
    %1992 = vmatpush1.msra.mxu0 %v603
    %1993 = vmatprep.subr.mxu0 %v608
    %1994 = vmatpush1.msra.mxu0 %v607
    %1995 = vmatprep.subr.mxu0 %v612
    %1996 = vmatpush1.msra.mxu0 %v611
    %1997 = vmatprep.subr.mxu0 %v616
    %1998 = vmatpush1.msra.mxu0 %v615
    %1999 = vmatprep.subr.mxu0 %v620
    %2000 = vmatpush1.msra.mxu0 %v619
    %2001 = vmatprep.subr.mxu0 %v624
    %2002 = vmatpush1.msra.mxu0 %v623
    %2003 = vmatprep.subr.mxu0 %v628
    %2004 = vmatpush1.msra.mxu0 %v627
    %2005 = vmatprep.subr.mxu0 %v632
    %2006 = vmatpush1.msra.mxu0 %v631
    %2007 = vmatprep.subr.mxu0 %v636
    %2008 = vmatpush1.msra.mxu0 %v635
    %2009 = vmatprep.subr.mxu0 %v640
    %2010 = vmatpush1.msra.mxu0 %v639
    %2011 = vmatprep.subr.mxu0 0.0
    %2012 = vmatpush1.msra.mxu0 0.0
    %2013 = vmatprep.subr.mxu0 0.0
    %2014 = vmatpush1.msra.mxu0 0.0
    %2015 = vmatprep.subr.mxu0 0.0
    %2016 = vmatpush1.msra.mxu0 0.0
    %2017 = vmatprep.subr.mxu0 0.0
    %2018 = vmatpush1.msra.mxu0 0.0
    %2019 = vmatprep.subr.mxu0 0.0
    %2020 = vmatpush1.msra.mxu0 0.0
    %2021 = vmatprep.subr.mxu0 0.0
    %2022 = vmatpush1.msra.mxu0 0.0
    %2023 = vmatprep.subr.mxu0 0.0
    %2024 = vmatpush1.msra.mxu0 0.0
    %2025 = vmatprep.subr.mxu0 0.0
    %2026 = vmatpush1.msra.mxu0 0.0
    %2027 = vmatprep.subr.mxu0 0.0
    %2028 = vmatpush1.msra.mxu0 0.0
    %2029 = vmatprep.subr.mxu0 0.0
    %2030 = vmatpush1.msra.mxu0 0.0
    %2031 = vmatprep.subr.mxu0 0.0
    %2032 = vmatpush1.msra.mxu0 0.0
    %2033 = vmatprep.subr.mxu0 0.0
    %2034 = vmatpush1.msra.mxu0 0.0
    %2035 = vmatprep.subr.mxu0 0.0
    %2036 = vmatpush1.msra.mxu0 0.0
    %2037 = vmatprep.subr.mxu0 0.0
    %2038 = vmatpush1.msra.mxu0 0.0
    %2039 = vmatprep.subr.mxu0 0.0
    %2040 = vmatpush1.msra.mxu0 0.0
    %2041 = vmatprep.subr.mxu0 0.0
    %2042 = vmatpush1.msra.mxu0 0.0
    %2043 = vmatprep.mubr.f32.mxu0 0.0
    %2044 = vmatmul.mubr.f32.gmra.mrb[0].mxu0 %v1902
    %v2045 = vpop.f32.mrb[0].mxu0
    %v2046 = vadd.f32 0.0, %v2045
    %v2047 = vpop.f32.mrb[0].mxu0
    %v2048 = vadd.f32 0.0, %v2047
    %2049 = vdwg.mxu0
    %v2050 = vadd.f32 %v1904, %v1975
    %v2051 = vadd.f32 %v1905, %v1977
    %v2052 = vadd.f32 %v1906, %v2046
    %v2053 = vadd.f32 %v1907, %v2048
    %v2054 = vxor.u32 %v2050, 2147483648
    %v2055 = vmul.f32 %v2054, 1.442695
    %v2056 = vpow.pop %v2055
    %v2057 = vadd.f32 %v2056, 1.0
    %v2058 = vrcp.pop %v2057
    %v2059 = vmul.f32 1.0, %v2058
    %v2060 = vxor.u32 %v2051, 2147483648
    %v2061 = vmul.f32 %v2060, 1.442695
    %v2062 = vpow.pop %v2061
    %v2063 = vadd.f32 %v2062, 1.0
    %v2064 = vrcp.pop %v2063
    %v2065 = vmul.f32 1.0, %v2064
    %v2066 = vtanh.pop %v2052
    %v2067 = vxor.u32 %v2053, 2147483648
    %v2068 = vmul.f32 %v2067, 1.442695
    %v2069 = vpow.pop %v2068
    %v2070 = vadd.f32 %v2069, 1.0
    %v2071 = vrcp.pop %v2070
    %v2072 = vmul.f32 1.0, %v2071
    %v2073 = vmul.f32 %v2065, %v1903
    %v2074 = vmul.f32 %v2059, %v2066
    %v2075 = vadd.f32 %v2073, %v2074
    %v2076 = vtanh.pop %v2075
    %v2077 = vmul.f32 %v2072, %v2076
    %v2078 = vsel %vm91, 1, 0
    %2079 = vset.pattern.permute.xlu0 0
    %2080 = vperm.xlu0 %2079, %v2078
    %v2081 = vpop.permute.xlu0 %2080
    %vm2082 = vcmp.eq.s32.totalorder %v2081, 1
    %v2083 = vsel %vm2082, %v2077, %v1902
    %v2084 = vld [vmem:[%s0] sm:$0xff]
    %vm2085 = vcmask 64512
    %v2087 = vsel %vm2085, %v2084, 0
    %2089 = vmatprep.subr.mxu0 0.0
    %2090 = vmatpush1.msra.mxu0 %v2083
    %2091 = vmatprep.subr.mxu0 0.0
    %2092 = vmatpush1.msra.mxu0 0.0
    %2093 = vmatprep.subr.mxu0 0.0
    %2094 = vmatpush1.msra.mxu0 0.0
    %2095 = vmatprep.subr.mxu0 0.0
    %2096 = vmatpush1.msra.mxu0 0.0
    %2097 = vmatprep.subr.mxu0 0.0
    %2098 = vmatpush1.msra.mxu0 0.0
    %2099 = vmatprep.subr.mxu0 0.0
    %2100 = vmatpush1.msra.mxu0 0.0
    %2101 = vmatprep.subr.mxu0 0.0
    %2102 = vmatpush1.msra.mxu0 0.0
    %2103 = vmatprep.subr.mxu0 0.0
    %2104 = vmatpush1.msra.mxu0 0.0
    %2105 = vmatprep.subr.mxu0 0.0
    %2106 = vmatpush1.msra.mxu0 0.0
    %2107 = vmatprep.subr.mxu0 0.0
    %2108 = vmatpush1.msra.mxu0 0.0
    %2109 = vmatprep.subr.mxu0 0.0
    %2110 = vmatpush1.msra.mxu0 0.0
    %2111 = vmatprep.subr.mxu0 0.0
    %2112 = vmatpush1.msra.mxu0 0.0
    %2113 = vmatprep.subr.mxu0 0.0
    %2114 = vmatpush1.msra.mxu0 0.0
    %2115 = vmatprep.subr.mxu0 0.0
    %2116 = vmatpush1.msra.mxu0 0.0
    %2117 = vmatprep.subr.mxu0 0.0
    %2118 = vmatpush1.msra.mxu0 0.0
    %2119 = vmatprep.subr.mxu0 0.0
    %2120 = vmatpush1.msra.mxu0 0.0
    %2121 = vmatprep.subr.mxu0 0.0
    %2122 = vmatpush1.msra.mxu0 0.0
    %2123 = vmatprep.subr.mxu0 0.0
    %2124 = vmatpush1.msra.mxu0 0.0
    %2125 = vmatprep.subr.mxu0 0.0
    %2126 = vmatpush1.msra.mxu0 0.0
    %2127 = vmatprep.subr.mxu0 0.0
    %2128 = vmatpush1.msra.mxu0 0.0
    %2129 = vmatprep.subr.mxu0 0.0
    %2130 = vmatpush1.msra.mxu0 0.0
    %2131 = vmatprep.subr.mxu0 0.0
    %2132 = vmatpush1.msra.mxu0 0.0
    %2133 = vmatprep.subr.mxu0 0.0
    %2134 = vmatpush1.msra.mxu0 0.0
    %2135 = vmatprep.subr.mxu0 0.0
    %2136 = vmatpush1.msra.mxu0 0.0
    %2137 = vmatprep.subr.mxu0 0.0
    %2138 = vmatpush1.msra.mxu0 0.0
    %2139 = vmatprep.subr.mxu0 0.0
    %2140 = vmatpush1.msra.mxu0 0.0
    %2141 = vmatprep.subr.mxu0 0.0
    %2142 = vmatpush1.msra.mxu0 0.0
    %2143 = vmatprep.subr.mxu0 0.0
    %2144 = vmatpush1.msra.mxu0 0.0
    %2145 = vmatprep.subr.mxu0 0.0
    %2146 = vmatpush1.msra.mxu0 0.0
    %2147 = vmatprep.subr.mxu0 0.0
    %2148 = vmatpush1.msra.mxu0 0.0
    %2149 = vmatprep.subr.mxu0 0.0
    %2150 = vmatpush1.msra.mxu0 0.0
    %2151 = vmatprep.subr.mxu0 0.0
    %2152 = vmatpush1.msra.mxu0 0.0
    %2153 = vmatprep.mubr.f32.mxu0 0.0
    %2154 = vmatmul.mubr.f32.gmra.mrb[0].mxu0 %v2087
    %v2155 = vpop.f32.mrb[0].mxu0
    %v2156 = vadd.f32 0.0, %v2155
    %v2157 = vpop.f32.mrb[0].mxu0
    %2158 = vdwg.mxu0
    %v2159 = vld [vmem:[%s7] sm:$0xff]
    %v2160 = vld [vmem:[%s7 + $0x8] sm:$0xff]
    %v2161 = vld [vmem:[%s7 + $0x10] sm:$0xff]
    %v2162 = vld [vmem:[%s7 + $0x18] sm:$0xff]
    %v2163 = vld [vmem:[%s7 + $0x20] sm:$0xff]
    %v2164 = vld [vmem:[%s7 + $0x28] sm:$0xff]
    %v2165 = vld [vmem:[%s7 + $0x30] sm:$0xff]
    %v2166 = vld [vmem:[%s7 + $0x38] sm:$0xff]
    %v2167 = vld [vmem:[%s7 + $0x40] sm:$0xff]
    %v2168 = vld [vmem:[%s7 + $0x48] sm:$0xff]
    %v2169 = vld [vmem:[%s7 + $0x50] sm:$0xff]
    %v2170 = vld [vmem:[%s7 + $0x58] sm:$0xff]
    %v2171 = vld [vmem:[%s7 + $0x60] sm:$0xff]
    %v2172 = vld [vmem:[%s7 + $0x68] sm:$0xff]
    %v2173 = vld [vmem:[%s7 + $0x70] sm:$0xff]
    %v2174 = vld [vmem:[%s7 + $0x78] sm:$0xff]
    %v2175 = vld [vmem:[%s8] sm:$0x1]
    %v2177 = vlaneseq
    %v2178 = vshrl.u32 %v2177, 7
    %v2179 = vsub.s32 0, %v2178
    %v2180 = vrot.slane %v2175, %v2179
    %2182 = vmatprep.subr.mxu0 0.0
    %2183 = vmatpush1.msra.mxu0 %v2159
    %2184 = vmatprep.subr.mxu0 0.0
    %2185 = vmatpush1.msra.mxu0 %v2160
    %2186 = vmatprep.subr.mxu0 0.0
    %2187 = vmatpush1.msra.mxu0 %v2161
    %2188 = vmatprep.subr.mxu0 0.0
    %2189 = vmatpush1.msra.mxu0 %v2162
    %2190 = vmatprep.subr.mxu0 0.0
    %2191 = vmatpush1.msra.mxu0 %v2163
    %2192 = vmatprep.subr.mxu0 0.0
    %2193 = vmatpush1.msra.mxu0 %v2164
    %2194 = vmatprep.subr.mxu0 0.0
    %2195 = vmatpush1.msra.mxu0 %v2165
    %2196 = vmatprep.subr.mxu0 0.0
    %2197 = vmatpush1.msra.mxu0 %v2166
    %2198 = vmatprep.subr.mxu0 0.0
    %2199 = vmatpush1.msra.mxu0 %v2167
    %2200 = vmatprep.subr.mxu0 0.0
    %2201 = vmatpush1.msra.mxu0 %v2168
    %2202 = vmatprep.subr.mxu0 0.0
    %2203 = vmatpush1.msra.mxu0 %v2169
    %2204 = vmatprep.subr.mxu0 0.0
    %2205 = vmatpush1.msra.mxu0 %v2170
    %2206 = vmatprep.subr.mxu0 0.0
    %2207 = vmatpush1.msra.mxu0 %v2171
    %2208 = vmatprep.subr.mxu0 0.0
    %2209 = vmatpush1.msra.mxu0 %v2172
    %2210 = vmatprep.subr.mxu0 0.0
    %2211 = vmatpush1.msra.mxu0 %v2173
    %2212 = vmatprep.subr.mxu0 0.0
    %2213 = vmatpush1.msra.mxu0 %v2174
    %2214 = vmatprep.subr.mxu0 0.0
    %2215 = vmatpush1.msra.mxu0 0.0
    %2216 = vmatprep.subr.mxu0 0.0
    %2217 = vmatpush1.msra.mxu0 0.0
    %2218 = vmatprep.subr.mxu0 0.0
    %2219 = vmatpush1.msra.mxu0 0.0
    %2220 = vmatprep.subr.mxu0 0.0
    %2221 = vmatpush1.msra.mxu0 0.0
    %2222 = vmatprep.subr.mxu0 0.0
    %2223 = vmatpush1.msra.mxu0 0.0
    %2224 = vmatprep.subr.mxu0 0.0
    %2225 = vmatpush1.msra.mxu0 0.0
    %2226 = vmatprep.subr.mxu0 0.0
    %2227 = vmatpush1.msra.mxu0 0.0
    %2228 = vmatprep.subr.mxu0 0.0
    %2229 = vmatpush1.msra.mxu0 0.0
    %2230 = vmatprep.subr.mxu0 0.0
    %2231 = vmatpush1.msra.mxu0 0.0
    %2232 = vmatprep.subr.mxu0 0.0
    %2233 = vmatpush1.msra.mxu0 0.0
    %2234 = vmatprep.subr.mxu0 0.0
    %2235 = vmatpush1.msra.mxu0 0.0
    %2236 = vmatprep.subr.mxu0 0.0
    %2237 = vmatpush1.msra.mxu0 0.0
    %2238 = vmatprep.subr.mxu0 0.0
    %2239 = vmatpush1.msra.mxu0 0.0
    %2240 = vmatprep.subr.mxu0 0.0
    %2241 = vmatpush1.msra.mxu0 0.0
    %2242 = vmatprep.subr.mxu0 0.0
    %2243 = vmatpush1.msra.mxu0 0.0
    %2244 = vmatprep.subr.mxu0 0.0
    %2245 = vmatpush1.msra.mxu0 0.0
    %2246 = vmatprep.mubr.f32.mxu0 0.0
    %2247 = vmatmul.mubr.f32.gmra.mrb[0].mxu0 %v2156
    %v2248 = vpop.f32.mrb[0].mxu0
    %v2249 = vadd.f32 %v2180, %v2248
    %v2250 = vpop.f32.mrb[0].mxu0
    %2251 = vdwg.mxu0
    %v2252 = vmax.f32 %v2249, 0.0
    %v2253 = vld [vmem:[%s9] sm:$0xff]
    %v2254 = vld [vmem:[%s9 + $0x8] sm:$0xff]
    %v2255 = vld [vmem:[%s9 + $0x10] sm:$0xff]
    %v2256 = vld [vmem:[%s9 + $0x18] sm:$0xff]
    %v2257 = vld [vmem:[%s9 + $0x20] sm:$0xff]
    %v2258 = vld [vmem:[%s9 + $0x28] sm:$0xff]
    %v2259 = vld [vmem:[%s9 + $0x30] sm:$0xff]
    %v2260 = vld [vmem:[%s9 + $0x38] sm:$0xff]
    %v2261 = vld [vmem:[%s10] sm:$0x1]
    %v2263 = vlaneseq
    %v2264 = vshrl.u32 %v2263, 7
    %v2265 = vsub.s32 0, %v2264
    %v2266 = vrot.slane %v2261, %v2265
    %v2269 = vsel %vm290, %v2252, 0
    %2271 = vmatprep.subr.mxu0 0.0
    %2272 = vmatpush1.msra.mxu0 %v2253
    %2273 = vmatprep.subr.mxu0 0.0
    %2274 = vmatpush1.msra.mxu0 %v2254
    %2275 = vmatprep.subr.mxu0 0.0
    %2276 = vmatpush1.msra.mxu0 %v2255
    %2277 = vmatprep.subr.mxu0 0.0
    %2278 = vmatpush1.msra.mxu0 %v2256
    %2279 = vmatprep.subr.mxu0 0.0
    %2280 = vmatpush1.msra.mxu0 %v2257
    %2281 = vmatprep.subr.mxu0 0.0
    %2282 = vmatpush1.msra.mxu0 %v2258
    %2283 = vmatprep.subr.mxu0 0.0
    %2284 = vmatpush1.msra.mxu0 %v2259
    %2285 = vmatprep.subr.mxu0 0.0
    %2286 = vmatpush1.msra.mxu0 %v2260
    %2287 = vmatprep.subr.mxu0 0.0
    %2288 = vmatpush1.msra.mxu0 0.0
    %2289 = vmatprep.subr.mxu0 0.0
    %2290 = vmatpush1.msra.mxu0 0.0
    %2291 = vmatprep.subr.mxu0 0.0
    %2292 = vmatpush1.msra.mxu0 0.0
    %2293 = vmatprep.subr.mxu0 0.0
    %2294 = vmatpush1.msra.mxu0 0.0
    %2295 = vmatprep.subr.mxu0 0.0
    %2296 = vmatpush1.msra.mxu0 0.0
    %2297 = vmatprep.subr.mxu0 0.0
    %2298 = vmatpush1.msra.mxu0 0.0
    %2299 = vmatprep.subr.mxu0 0.0
    %2300 = vmatpush1.msra.mxu0 0.0
    %2301 = vmatprep.subr.mxu0 0.0
    %2302 = vmatpush1.msra.mxu0 0.0
    %2303 = vmatprep.subr.mxu0 0.0
    %2304 = vmatpush1.msra.mxu0 0.0
    %2305 = vmatprep.subr.mxu0 0.0
    %2306 = vmatpush1.msra.mxu0 0.0
    %2307 = vmatprep.subr.mxu0 0.0
    %2308 = vmatpush1.msra.mxu0 0.0
    %2309 = vmatprep.subr.mxu0 0.0
    %2310 = vmatpush1.msra.mxu0 0.0
    %2311 = vmatprep.subr.mxu0 0.0
    %2312 = vmatpush1.msra.mxu0 0.0
    %2313 = vmatprep.subr.mxu0 0.0
    %2314 = vmatpush1.msra.mxu0 0.0
    %2315 = vmatprep.subr.mxu0 0.0
    %2316 = vmatpush1.msra.mxu0 0.0
    %2317 = vmatprep.subr.mxu0 0.0
    %2318 = vmatpush1.msra.mxu0 0.0
    %2319 = vmatprep.subr.mxu0 0.0
    %2320 = vmatpush1.msra.mxu0 0.0
    %2321 = vmatprep.subr.mxu0 0.0
    %2322 = vmatpush1.msra.mxu0 0.0
    %2323 = vmatprep.subr.mxu0 0.0
    %2324 = vmatpush1.msra.mxu0 0.0
    %2325 = vmatprep.subr.mxu0 0.0
    %2326 = vmatpush1.msra.mxu0 0.0
    %2327 = vmatprep.subr.mxu0 0.0
    %2328 = vmatpush1.msra.mxu0 0.0
    %2329 = vmatprep.subr.mxu0 0.0
    %2330 = vmatpush1.msra.mxu0 0.0
    %2331 = vmatprep.subr.mxu0 0.0
    %2332 = vmatpush1.msra.mxu0 0.0
    %2333 = vmatprep.subr.mxu0 0.0
    %2334 = vmatpush1.msra.mxu0 0.0
    %2335 = vmatprep.mubr.f32.mxu0 0.0
    %2336 = vmatmul.mubr.f32.gmra.mrb[0].mxu0 %v2269
    %v2337 = vpop.f32.mrb[0].mxu0
    %v2338 = vadd.f32 %v2266, %v2337
    %v2339 = vpop.f32.mrb[0].mxu0
    %2340 = vdwg.mxu0
    %v2341 = vmax.f32 %v2338, 0.0
    %v2342 = vld [vmem:[%s11] sm:$0xff]
    %v2343 = vld [vmem:[%s11 + $0x8] sm:$0xff]
    %v2344 = vld [vmem:[%s11 + $0x10] sm:$0xff]
    %v2345 = vld [vmem:[%s11 + $0x18] sm:$0xff]
    %v2346 = vld [vmem:[%s12] sm:$0x1]
    %v2348 = vlaneseq
    %v2349 = vshrl.u32 %v2348, 7
    %v2350 = vsub.s32 0, %v2349
    %v2351 = vrot.slane %v2346, %v2350
    %vm2353 = vcmask 261120
    %v2355 = vsel %vm2353, %v2341, 0
    %2357 = vmatprep.subr.mxu0 0.0
    %2358 = vmatpush1.msra.mxu0 %v2342
    %2359 = vmatprep.subr.mxu0 0.0
    %2360 = vmatpush1.msra.mxu0 %v2343
    %2361 = vmatprep.subr.mxu0 0.0
    %2362 = vmatpush1.msra.mxu0 %v2344
    %2363 = vmatprep.subr.mxu0 0.0
    %2364 = vmatpush1.msra.mxu0 %v2345
    %2365 = vmatprep.subr.mxu0 0.0
    %2366 = vmatpush1.msra.mxu0 0.0
    %2367 = vmatprep.subr.mxu0 0.0
    %2368 = vmatpush1.msra.mxu0 0.0
    %2369 = vmatprep.subr.mxu0 0.0
    %2370 = vmatpush1.msra.mxu0 0.0
    %2371 = vmatprep.subr.mxu0 0.0
    %2372 = vmatpush1.msra.mxu0 0.0
    %2373 = vmatprep.subr.mxu0 0.0
    %2374 = vmatpush1.msra.mxu0 0.0
    %2375 = vmatprep.subr.mxu0 0.0
    %2376 = vmatpush1.msra.mxu0 0.0
    %2377 = vmatprep.subr.mxu0 0.0
    %2378 = vmatpush1.msra.mxu0 0.0
    %2379 = vmatprep.subr.mxu0 0.0
    %2380 = vmatpush1.msra.mxu0 0.0
    %2381 = vmatprep.subr.mxu0 0.0
    %2382 = vmatpush1.msra.mxu0 0.0
    %2383 = vmatprep.subr.mxu0 0.0
    %2384 = vmatpush1.msra.mxu0 0.0
    %2385 = vmatprep.subr.mxu0 0.0
    %2386 = vmatpush1.msra.mxu0 0.0
    %2387 = vmatprep.subr.mxu0 0.0
    %2388 = vmatpush1.msra.mxu0 0.0
    %2389 = vmatprep.subr.mxu0 0.0
    %2390 = vmatpush1.msra.mxu0 0.0
    %2391 = vmatprep.subr.mxu0 0.0
    %2392 = vmatpush1.msra.mxu0 0.0
    %2393 = vmatprep.subr.mxu0 0.0
    %2394 = vmatpush1.msra.mxu0 0.0
    %2395 = vmatprep.subr.mxu0 0.0
    %2396 = vmatpush1.msra.mxu0 0.0
    %2397 = vmatprep.subr.mxu0 0.0
    %2398 = vmatpush1.msra.mxu0 0.0
    %2399 = vmatprep.subr.mxu0 0.0
    %2400 = vmatpush1.msra.mxu0 0.0
    %2401 = vmatprep.subr.mxu0 0.0
    %2402 = vmatpush1.msra.mxu0 0.0
    %2403 = vmatprep.subr.mxu0 0.0
    %2404 = vmatpush1.msra.mxu0 0.0
    %2405 = vmatprep.subr.mxu0 0.0
    %2406 = vmatpush1.msra.mxu0 0.0
    %2407 = vmatprep.subr.mxu0 0.0
    %2408 = vmatpush1.msra.mxu0 0.0
    %2409 = vmatprep.subr.mxu0 0.0
    %2410 = vmatpush1.msra.mxu0 0.0
    %2411 = vmatprep.subr.mxu0 0.0
    %2412 = vmatpush1.msra.mxu0 0.0
    %2413 = vmatprep.subr.mxu0 0.0
    %2414 = vmatpush1.msra.mxu0 0.0
    %2415 = vmatprep.subr.mxu0 0.0
    %2416 = vmatpush1.msra.mxu0 0.0
    %2417 = vmatprep.subr.mxu0 0.0
    %2418 = vmatpush1.msra.mxu0 0.0
    %2419 = vmatprep.subr.mxu0 0.0
    %2420 = vmatpush1.msra.mxu0 0.0
    %2421 = vmatprep.mubr.f32.mxu0 0.0
    %2422 = vmatmul.mubr.f32.gmra.mrb[0].mxu0 %v2355
    %v2423 = vpop.f32.mrb[0].mxu0
    %v2424 = vadd.f32 %v2351, %v2423
    %v2425 = vpop.f32.mrb[0].mxu0
    %2426 = vdwg.mxu0
    %v2427 = vmax.f32 %v2424, 0.0
    %2428 = vst [vmem:[%s13] sm:$0xff] %v2427
    // Predicated region
    $region58: #{lstm_discriminator_forward.1} parent=1 // pred_check
      _
    $region59: #{lstm_discriminator_forward.1} parent=1 // pred_check_branch
      %2430 = sbr.rel (0) target = $region61
    $region60: #{lstm_discriminator_forward.1} parent=1 // pred_region
      _
    $region61: #{lstm_discriminator_forward.1} parent=1 // pred_fallthru
      _
    // Predicated region
    $region62: #{lstm_discriminator_forward.1} parent=1 // pred_check
      _
    $region63: #{lstm_discriminator_forward.1} parent=1 // pred_check_branch
      %2432 = sbr.rel (0) target = $region65
    $region64: #{lstm_discriminator_forward.1} parent=1 // pred_region
      _
    $region65: #{lstm_discriminator_forward.1} parent=1 // pred_fallthru
      _
    %2433 = vsyncpa [#allocation4], 1

</llo_original>
